<compile_context>
chip_gen: v7x
topology: tpu7x:2x2x1
jax: 0.10.0
libtpu: 0.0.40
codegen_flags: <defaults>
</compile_context>

<pallas_src>
import numpy as np
import jax
import jax.numpy as jnp
from jax.experimental import pallas as pl
from jax.experimental.pallas import tpu as pltpu


# ----------------------------------------------------------------------------
# fused kernel
# ----------------------------------------------------------------------------
def make_resblock_kernel(N, H, W, Cin, Cout, Ho, Wo, strides, use_1x1_conv, eps):
    f32, bf16 = jnp.float32, jnp.bfloat16
    WC = W * Cin            # lane width of each (H-padded) input row
    NW = Wo * Cout          # lane width of every activation / output row

    def kernel(*refs):
        if use_1x1_conv:
            (xpad_ref, w1a_ref, w1b_ref, w1c_ref,
             w2a_ref, w2b_ref, w2c_ref, bmat_ref,
             g1_ref, bt1_ref, g2_ref, bt2_ref, b3_ref, out_ref) = refs
        else:
            (xpad_ref, xs_ref, w1a_ref, w1b_ref, w1c_ref,
             w2a_ref, w2b_ref, w2c_ref, bmat_ref,
             g1_ref, bt1_ref, g2_ref, bt2_ref, out_ref) = refs

        # ------- conv1 (+ fused 1x1 skip): three lane-dense banded matmuls ----
        def xslab(dh):                      # rows ho*stride + dh of H-padded x
            if strides == 1:
                v = xpad_ref[:, dh:dh + Ho, :]
            else:
                v = xpad_ref[:, pl.ds(dh, Ho, strides), :]
            return v.reshape(N * Ho, WC)

        y1 = jnp.dot(xslab(0), w1a_ref[...], preferred_element_type=f32)
        mid = jnp.dot(xslab(1), w1b_ref[...], preferred_element_type=f32)
        y1 = y1 + mid[:, :NW]
        y1 = y1 + jnp.dot(xslab(2), w1c_ref[...], preferred_element_type=f32)
        # conv1 bias omitted: exactly cancelled by bn1's mean subtraction.

        if use_1x1_conv:
            skip = mid[:, NW:] + b3_ref[...]        # fused 1x1-conv skip (f32)
        else:
            skip = xs_ref[...]                      # identity skip, kept in f32

        # ------- BatchNorm (training-mode batch stats), lane-dense, two-pass --
        def batchnorm(y, g_t, bt_t):
            rs = jnp.sum(y, axis=0, keepdims=True)                       # (1, NW)
            m_t = jnp.dot(rs, bmat_ref[...], preferred_element_type=f32)  # mean, tiled
            c = y - m_t
            vs = jnp.sum(c * c, axis=0, keepdims=True)
            v_t = jnp.dot(vs, bmat_ref[...], preferred_element_type=f32)  # var, tiled
            sc_t = g_t * jax.lax.rsqrt(v_t + eps)
            return c * sc_t + bt_t

        y1 = jnp.maximum(batchnorm(y1, g1_ref[...], bt1_ref[...]), 0.0).astype(bf16)

        # ------- conv2: H-halo = two zero rows; W-halo lives in the weights ---
        zrow = jnp.zeros((N, 1, NW), bf16)
        y1p = jnp.concatenate([zrow, y1.reshape(N, Ho, NW), zrow], axis=1)

        def yslab(dh):
            return y1p[:, dh:dh + Ho, :].reshape(N * Ho, NW)

        y2 = jnp.dot(yslab(0), w2a_ref[...], preferred_element_type=f32)
        y2 = y2 + jnp.dot(yslab(1), w2b_ref[...], preferred_element_type=f32)
        y2 = y2 + jnp.dot(yslab(2), w2c_ref[...], preferred_element_type=f32)
        # conv2 bias omitted: exactly cancelled by bn2's mean subtraction.

        y2 = batchnorm(y2, g2_ref[...], bt2_ref[...])

        # ------- residual add + ReLU, lane-dense store -------------------------
        out_ref[...] = jnp.maximum(y2 + skip, 0.0).astype(out_ref.dtype)

    return kernel


# ----------------------------------------------------------------------------
# wrapper-side banded weight construction (runs once, plain XLA)
# ----------------------------------------------------------------------------
def _banded_conv3_weights(w_hwio, w_in, wo_out, stride, cin, cout, dtype):
    """Per-dh banded matrices M_dh with
       M_dh[(wo*stride + dw - 1)*cin + ci, wo*cout + co] = w[dh, dw, ci, co];
    rows of taps that fall into the width padding are simply left zero."""
    wo = np.arange(wo_out)
    mats = []
    for dh in range(3):
        a = jnp.zeros((w_in, cin, wo_out, cout), jnp.float32)
        for dw in range(3):
            src = wo * stride + dw - 1
            valid = (src >= 0) & (src < w_in)
            if valid.any():
                a = a.at[src[valid], :, wo[valid], :].set(
                    jnp.broadcast_to(w_hwio[dh, dw], (int(valid.sum()), cin, cout)))
        mats.append(a.reshape(w_in * cin, wo_out * cout).astype(dtype))
    return mats


def _banded_1x1_weights(w3, w_in, wo_out, stride, cin, cout, dtype):
    """1x1-conv skip expressed as extra output columns for the dh=1 matmul."""
    wo = np.arange(wo_out)
    b = jnp.zeros((w_in, cin, wo_out, cout), jnp.float32)
    b = b.at[wo * stride, :, wo, :].set(jnp.broadcast_to(w3, (wo_out, cin, cout)))
    return b.reshape(w_in * cin, wo_out * cout).astype(dtype)


def resblock_forward(x_nchw, params, *, strides=1, use_1x1_conv=False, eps=1e-5):
    """PyTorch-equivalent ResBlock forward.  Input/output layout: NCHW (f32)."""
    f32, bf16 = jnp.float32, jnp.bfloat16
    x = jnp.transpose(x_nchw, (0, 2, 3, 1))              # NCHW -> NHWC (glue)
    N, H, W, Cin = x.shape
    Cout = params["w1"].shape[-1]
    Ho = (H - 1) // strides + 1
    Wo = (W - 1) // strides + 1
    NW = Wo * Cout
    R = N * Ho * Wo
    if not use_1x1_conv:
        assert Cin == Cout and strides == 1, "identity skip needs matching shapes"

    # H-halo only (W-halo is folded into the banded weights); bf16 halves DMA.
    xpad = jnp.pad(x, ((0, 0), (1, 1), (0, 0), (0, 0)))
    xpad = xpad.reshape(N, H + 2, W * Cin).astype(bf16)

    w1m = _banded_conv3_weights(params["w1"], W, Wo, strides, Cin, Cout, bf16)
    w2m = _banded_conv3_weights(params["w2"], Wo, Wo, 1, Cout, Cout, bf16)

    def tiled(v):                 # per-channel (Cout,) -> lane-dense (1, Wo*Cout)
        return jnp.tile(v.astype(f32).reshape(1, Cout), (1, Wo))

    # channel-averaging matrix: (row-sums @ bmat) = per-channel mean, re-tiled.
    bmat = jnp.tile(jnp.eye(Cout, dtype=f32), (Wo, Wo)) * (1.0 / R)      # (NW, NW)

    if use_1x1_conv:
        w1b = jnp.concatenate(
            [w1m[1],
             _banded_1x1_weights(params["w3"], W, Wo, strides, Cin, Cout, bf16)],
            axis=1)
        inputs = [xpad, w1m[0], w1b, w1m[2]]
    else:
        xs = x[:, ::strides, ::strides, :].reshape(N * Ho, NW).astype(f32)
        inputs = [xpad, xs, w1m[0], w1m[1], w1m[2]]
    inputs += [w2m[0], w2m[1], w2m[2], bmat,
               tiled(params["g1"]), tiled(params["bt1"]),
               tiled(params["g2"]), tiled(params["bt2"])]
    if use_1x1_conv:
        inputs.append(tiled(params["b3"]))

    kernel = make_resblock_kernel(N, H, W, Cin, Cout, Ho, Wo,
                                  strides, use_1x1_conv, eps)

    vmem = pl.BlockSpec(memory_space=pltpu.MemorySpace.VMEM)
    out = pl.pallas_call(
        kernel,
        out_shape=jax.ShapeDtypeStruct((N * Ho, NW), f32),   # lane-dense output
        in_specs=[vmem] * len(inputs),
        out_specs=vmem,
        compiler_params=pltpu.CompilerParams(
            vmem_limit_bytes=32 * 1024 * 1024),   # kernel uses <2 MiB; v7x-safe
    )(*inputs)

    out = out.reshape(N, Ho, Wo, Cout)
    return jnp.transpose(out, (0, 3, 1, 2))                  # NHWC -> NCHW


# ------------------------- pure-JAX reference (for checking) -------------------
def resblock_ref(x_nchw, params, strides, use_1x1_conv, eps=1e-5):
    x = jnp.transpose(x_nchw, (0, 2, 3, 1))
    dn = ("NHWC", "HWIO", "NHWC")

    def conv(v, w, b, s, pad):
        y = jax.lax.conv_general_dilated(v, w, (s, s), pad, dimension_numbers=dn)
        return y + b.reshape(1, 1, 1, -1)

    def bn(y, g, bt):
        m = jnp.mean(y, axis=(0, 1, 2), keepdims=True)
        v = jnp.mean((y - m) ** 2, axis=(0, 1, 2), keepdims=True)
        return (y - m) * jax.lax.rsqrt(v + eps) * g.reshape(1, 1, 1, -1) \
               + bt.reshape(1, 1, 1, -1)

    y = jax.nn.relu(bn(conv(x, params["w1"], params["b1"], strides,
                            ((1, 1), (1, 1))), params["g1"], params["bt1"]))
    # The fused kernel keeps the inter-conv activation in bf16 on the MXU path;
    # mirror that rounding so the check isolates kernel correctness.
    y = y.astype(jnp.bfloat16).astype(jnp.float32)
    y = bn(conv(y, params["w2"], params["b2"], 1, ((1, 1), (1, 1))),
           params["g2"], params["bt2"])
    if use_1x1_conv:
        cin, cout = params["w3"].shape
        skip = conv(x, params["w3"].reshape(1, 1, cin, cout), params["b3"],
                    strides, "VALID")
    else:
        skip = x
    out = jax.nn.relu(y + skip)
    return jnp.transpose(out, (0, 3, 1, 2))


# ------------------------- deterministic parameter init ------------------------
def init_params(key, cin, cout, use_1x1_conv):
    ks = jax.random.split(key, 10)

    def uni(k, shape, fan_in):
        bound = 1.0 / np.sqrt(fan_in)
        return jax.random.uniform(k, shape, jnp.float32, -bound, bound)

    def bf16_exact(v):              # conv weights ride the bf16 MXU path
        return v.astype(jnp.bfloat16).astype(jnp.float32)

    p = {
        "w1": bf16_exact(uni(ks[0], (3, 3, cin, cout), cin * 9)),
        "b1": uni(ks[1], (cout,), cin * 9),
        "w2": bf16_exact(uni(ks[2], (3, 3, cout, cout), cout * 9)),
        "b2": uni(ks[3], (cout,), cout * 9),
        # BN affine params (perturbed from gamma=1, beta=0 to exercise the math)
        "g1": 1.0 + 0.1 * jax.random.normal(ks[4], (cout,), jnp.float32),
        "bt1": 0.1 * jax.random.normal(ks[5], (cout,), jnp.float32),
        "g2": 1.0 + 0.1 * jax.random.normal(ks[6], (cout,), jnp.float32),
        "bt2": 0.1 * jax.random.normal(ks[7], (cout,), jnp.float32),
    }
    if use_1x1_conv:
        p["w3"] = bf16_exact(uni(ks[8], (cin, cout), cin))
        p["b3"] = uni(ks[9], (cout,), cin)
    return p


if __name__ == "__main__":
    key = jax.random.PRNGKey(0)
    configs = [
        # (N, Cin, Cout, H, W, strides, use_1x1_conv)
        dict(N=2, Cin=8,  Cout=16, H=16, W=16, strides=1, use_1x1=True),   # 1x1 skip
        dict(N=2, Cin=16, Cout=16, H=16, W=16, strides=1, use_1x1=False),  # identity
    ]
    for cfg in configs:
        key, kx, kp = jax.random.split(key, 3)
        x = jax.random.normal(kx, (cfg["N"], cfg["Cin"], cfg["H"], cfg["W"]),
                              jnp.float32)                  # NCHW, like PyTorch
        x = x.astype(jnp.bfloat16).astype(jnp.float32)      # bf16-exact activations
        params = init_params(kp, cfg["Cin"], cfg["Cout"], cfg["use_1x1"])

        out = resblock_forward(x, params, strides=cfg["strides"],
                               use_1x1_conv=cfg["use_1x1"])
        out = jax.block_until_ready(out)

        ref = resblock_ref(x, params, cfg["strides"], cfg["use_1x1"])
        assert out.shape == ref.shape, (out.shape, ref.shape)
        # bf16 inter-conv activation bounds any rounding disagreement ~1e-3.
        if not bool(jnp.allclose(out, ref, rtol=5e-3, atol=5e-3)):
            max_err = float(jnp.max(jnp.abs(out - ref)))
            raise SystemExit(
                f"mismatch vs JAX reference (use_1x1={cfg['use_1x1']}), "
                f"max abs err = {max_err}")
    print("KERNEL_OK")
</pallas_src>

<mosaic_0001>
module attributes {stable_mosaic.version = 11 : i64} {
  func.func @kernel(%arg0: memref<2x18x128xbf16, #tpu.memory_space<vmem>>, %arg1: memref<128x256xbf16, #tpu.memory_space<vmem>>, %arg2: memref<128x512xbf16, #tpu.memory_space<vmem>>, %arg3: memref<128x256xbf16, #tpu.memory_space<vmem>>, %arg4: memref<256x256xbf16, #tpu.memory_space<vmem>>, %arg5: memref<256x256xbf16, #tpu.memory_space<vmem>>, %arg6: memref<256x256xbf16, #tpu.memory_space<vmem>>, %arg7: memref<256x256xf32, #tpu.memory_space<vmem>>, %arg8: memref<1x256xf32, #tpu.memory_space<vmem>>, %arg9: memref<1x256xf32, #tpu.memory_space<vmem>>, %arg10: memref<1x256xf32, #tpu.memory_space<vmem>>, %arg11: memref<1x256xf32, #tpu.memory_space<vmem>>, %arg12: memref<1x256xf32, #tpu.memory_space<vmem>>, %arg13: memref<32x256xf32, #tpu.memory_space<vmem>>) attributes {dimension_semantics = [], scalar_prefetch = 0 : i64, scratch_operands = 0 : i64, tpu.core_type = #tpu.core_type<tc>} {
    %c0 = arith.constant 0 : index
    %c0_0 = arith.constant 0 : index
    %c0_1 = arith.constant 0 : index
    %0 = vector.load %arg0[%c0, %c0_0, %c0_1] : memref<2x18x128xbf16, #tpu.memory_space<vmem>>, vector<2x16x128xbf16>
    %1 = vector.shape_cast %0 : vector<2x16x128xbf16> to vector<32x128xbf16>
    %c0_2 = arith.constant 0 : index
    %c0_3 = arith.constant 0 : index
    %2 = vector.load %arg1[%c0_2, %c0_3] : memref<128x256xbf16, #tpu.memory_space<vmem>>, vector<128x256xbf16>
    %cst = arith.constant dense<0.000000e+00> : vector<32x256xf32>
    %3 = tpu.matmul %1, %2, %cst {dimension_numbers = #tpu.dot_dimension_numbers<[1], [0], [0], [1], [0, 0, 1, 1], [], []>} : vector<32x128xbf16>, vector<128x256xbf16>, vector<32x256xf32> -> vector<32x256xf32>
    %c0_4 = arith.constant 0 : index
    %c1 = arith.constant 1 : index
    %c0_5 = arith.constant 0 : index
    %4 = vector.load %arg0[%c0_4, %c1, %c0_5] : memref<2x18x128xbf16, #tpu.memory_space<vmem>>, vector<2x16x128xbf16>
    %5 = vector.shape_cast %4 : vector<2x16x128xbf16> to vector<32x128xbf16>
    %c0_6 = arith.constant 0 : index
    %c0_7 = arith.constant 0 : index
    %6 = vector.load %arg2[%c0_6, %c0_7] : memref<128x512xbf16, #tpu.memory_space<vmem>>, vector<128x512xbf16>
    %cst_8 = arith.constant dense<0.000000e+00> : vector<32x512xf32>
    %7 = tpu.matmul %5, %6, %cst_8 {dimension_numbers = #tpu.dot_dimension_numbers<[1], [0], [0], [1], [0, 0, 1, 1], [], []>} : vector<32x128xbf16>, vector<128x512xbf16>, vector<32x512xf32> -> vector<32x512xf32>
    %8 = vector.extract_strided_slice %7 {offsets = [0, 0], sizes = [32, 256], strides = [1, 1]} : vector<32x512xf32> to vector<32x256xf32>
    %9 = arith.addf %3, %8 : vector<32x256xf32>
    %c0_9 = arith.constant 0 : index
    %c2 = arith.constant 2 : index
    %c0_10 = arith.constant 0 : index
    %10 = vector.load %arg0[%c0_9, %c2, %c0_10] : memref<2x18x128xbf16, #tpu.memory_space<vmem>>, vector<2x16x128xbf16>
    %11 = vector.shape_cast %10 : vector<2x16x128xbf16> to vector<32x128xbf16>
    %c0_11 = arith.constant 0 : index
    %c0_12 = arith.constant 0 : index
    %12 = vector.load %arg3[%c0_11, %c0_12] : memref<128x256xbf16, #tpu.memory_space<vmem>>, vector<128x256xbf16>
    %cst_13 = arith.constant dense<0.000000e+00> : vector<32x256xf32>
    %13 = tpu.matmul %11, %12, %cst_13 {dimension_numbers = #tpu.dot_dimension_numbers<[1], [0], [0], [1], [0, 0, 1, 1], [], []>} : vector<32x128xbf16>, vector<128x256xbf16>, vector<32x256xf32> -> vector<32x256xf32>
    %14 = arith.addf %9, %13 : vector<32x256xf32>
    %15 = vector.extract_strided_slice %7 {offsets = [0, 256], sizes = [32, 256], strides = [1, 1]} : vector<32x512xf32> to vector<32x256xf32>
    %c0_14 = arith.constant 0 : index
    %c0_15 = arith.constant 0 : index
    %16 = vector.load %arg12[%c0_14, %c0_15] : memref<1x256xf32, #tpu.memory_space<vmem>>, vector<1x256xf32>
    %17 = vector.broadcast %16 : vector<1x256xf32> to vector<32x256xf32>
    %18 = arith.addf %15, %17 : vector<32x256xf32>
    %c0_16 = arith.constant 0 : index
    %c0_17 = arith.constant 0 : index
    %19 = vector.load %arg8[%c0_16, %c0_17] : memref<1x256xf32, #tpu.memory_space<vmem>>, vector<1x256xf32>
    %c0_18 = arith.constant 0 : index
    %c0_19 = arith.constant 0 : index
    %20 = vector.load %arg9[%c0_18, %c0_19] : memref<1x256xf32, #tpu.memory_space<vmem>>, vector<1x256xf32>
    %cst_20 = arith.constant dense<0.000000e+00> : vector<256xf32>
    %21 = vector.multi_reduction <add>, %14, %cst_20 [0] : vector<32x256xf32> to vector<256xf32>
    %22 = vector.shape_cast %21 : vector<256xf32> to vector<1x256xf32>
    %c0_21 = arith.constant 0 : index
    %c0_22 = arith.constant 0 : index
    %23 = vector.load %arg7[%c0_21, %c0_22] : memref<256x256xf32, #tpu.memory_space<vmem>>, vector<256x256xf32>
    %cst_23 = arith.constant dense<0.000000e+00> : vector<1x256xf32>
    %24 = tpu.matmul %22, %23, %cst_23 {dimension_numbers = #tpu.dot_dimension_numbers<[1], [0], [0], [1], [0, 0, 1, 1], [], []>} : vector<1x256xf32>, vector<256x256xf32>, vector<1x256xf32> -> vector<1x256xf32>
    %25 = vector.broadcast %24 : vector<1x256xf32> to vector<32x256xf32>
    %26 = arith.subf %14, %25 : vector<32x256xf32>
    %27 = arith.mulf %26, %26 : vector<32x256xf32>
    %cst_24 = arith.constant dense<0.000000e+00> : vector<256xf32>
    %28 = vector.multi_reduction <add>, %27, %cst_24 [0] : vector<32x256xf32> to vector<256xf32>
    %29 = vector.shape_cast %28 : vector<256xf32> to vector<1x256xf32>
    %c0_25 = arith.constant 0 : index
    %c0_26 = arith.constant 0 : index
    %30 = vector.load %arg7[%c0_25, %c0_26] : memref<256x256xf32, #tpu.memory_space<vmem>>, vector<256x256xf32>
    %cst_27 = arith.constant dense<0.000000e+00> : vector<1x256xf32>
    %31 = tpu.matmul %29, %30, %cst_27 {dimension_numbers = #tpu.dot_dimension_numbers<[1], [0], [0], [1], [0, 0, 1, 1], [], []>} : vector<1x256xf32>, vector<256x256xf32>, vector<1x256xf32> -> vector<1x256xf32>
    %cst_28 = arith.constant 9.99999974E-6 : f32
    %32 = vector.broadcast %cst_28 : f32 to vector<1x256xf32>
    %33 = arith.addf %31, %32 : vector<1x256xf32>
    %34 = math.rsqrt %33 : vector<1x256xf32>
    %35 = arith.mulf %19, %34 : vector<1x256xf32>
    %36 = vector.broadcast %35 : vector<1x256xf32> to vector<32x256xf32>
    %37 = arith.mulf %26, %36 : vector<32x256xf32>
    %38 = vector.broadcast %20 : vector<1x256xf32> to vector<32x256xf32>
    %39 = arith.addf %37, %38 : vector<32x256xf32>
    %cst_29 = arith.constant 0.000000e+00 : f32
    %40 = vector.broadcast %cst_29 : f32 to vector<32x256xf32>
    %41 = arith.maximumf %39, %40 : vector<32x256xf32>
    %42 = arith.truncf %41 : vector<32x256xf32> to vector<32x256xbf16>
    %cst_30 = arith.constant 0.000000e+00 : bf16
    %43 = vector.broadcast %cst_30 : bf16 to vector<2x1x256xbf16>
    %44 = vector.shape_cast %42 : vector<32x256xbf16> to vector<2x16x256xbf16>
    %45 = tpu.concatenate %43, %44, %43 in 1 : vector<2x1x256xbf16>, vector<2x16x256xbf16>, vector<2x1x256xbf16> -> vector<2x18x256xbf16>
    %46 = vector.extract_strided_slice %45 {offsets = [0, 0, 0], sizes = [2, 16, 256], strides = [1, 1, 1]} : vector<2x18x256xbf16> to vector<2x16x256xbf16>
    %47 = vector.shape_cast %46 : vector<2x16x256xbf16> to vector<32x256xbf16>
    %c0_31 = arith.constant 0 : index
    %c0_32 = arith.constant 0 : index
    %48 = vector.load %arg4[%c0_31, %c0_32] : memref<256x256xbf16, #tpu.memory_space<vmem>>, vector<256x256xbf16>
    %cst_33 = arith.constant dense<0.000000e+00> : vector<32x256xf32>
    %49 = tpu.matmul %47, %48, %cst_33 {dimension_numbers = #tpu.dot_dimension_numbers<[1], [0], [0], [1], [0, 0, 1, 1], [], []>} : vector<32x256xbf16>, vector<256x256xbf16>, vector<32x256xf32> -> vector<32x256xf32>
    %50 = vector.extract_strided_slice %45 {offsets = [0, 1, 0], sizes = [2, 16, 256], strides = [1, 1, 1]} : vector<2x18x256xbf16> to vector<2x16x256xbf16>
    %51 = vector.shape_cast %50 : vector<2x16x256xbf16> to vector<32x256xbf16>
    %c0_34 = arith.constant 0 : index
    %c0_35 = arith.constant 0 : index
    %52 = vector.load %arg5[%c0_34, %c0_35] : memref<256x256xbf16, #tpu.memory_space<vmem>>, vector<256x256xbf16>
    %cst_36 = arith.constant dense<0.000000e+00> : vector<32x256xf32>
    %53 = tpu.matmul %51, %52, %cst_36 {dimension_numbers = #tpu.dot_dimension_numbers<[1], [0], [0], [1], [0, 0, 1, 1], [], []>} : vector<32x256xbf16>, vector<256x256xbf16>, vector<32x256xf32> -> vector<32x256xf32>
    %54 = arith.addf %49, %53 : vector<32x256xf32>
    %55 = vector.extract_strided_slice %45 {offsets = [0, 2, 0], sizes = [2, 16, 256], strides = [1, 1, 1]} : vector<2x18x256xbf16> to vector<2x16x256xbf16>
    %56 = vector.shape_cast %55 : vector<2x16x256xbf16> to vector<32x256xbf16>
    %c0_37 = arith.constant 0 : index
    %c0_38 = arith.constant 0 : index
    %57 = vector.load %arg6[%c0_37, %c0_38] : memref<256x256xbf16, #tpu.memory_space<vmem>>, vector<256x256xbf16>
    %cst_39 = arith.constant dense<0.000000e+00> : vector<32x256xf32>
    %58 = tpu.matmul %56, %57, %cst_39 {dimension_numbers = #tpu.dot_dimension_numbers<[1], [0], [0], [1], [0, 0, 1, 1], [], []>} : vector<32x256xbf16>, vector<256x256xbf16>, vector<32x256xf32> -> vector<32x256xf32>
    %59 = arith.addf %54, %58 : vector<32x256xf32>
    %c0_40 = arith.constant 0 : index
    %c0_41 = arith.constant 0 : index
    %60 = vector.load %arg10[%c0_40, %c0_41] : memref<1x256xf32, #tpu.memory_space<vmem>>, vector<1x256xf32>
    %c0_42 = arith.constant 0 : index
    %c0_43 = arith.constant 0 : index
    %61 = vector.load %arg11[%c0_42, %c0_43] : memref<1x256xf32, #tpu.memory_space<vmem>>, vector<1x256xf32>
    %cst_44 = arith.constant dense<0.000000e+00> : vector<256xf32>
    %62 = vector.multi_reduction <add>, %59, %cst_44 [0] : vector<32x256xf32> to vector<256xf32>
    %63 = vector.shape_cast %62 : vector<256xf32> to vector<1x256xf32>
    %c0_45 = arith.constant 0 : index
    %c0_46 = arith.constant 0 : index
    %64 = vector.load %arg7[%c0_45, %c0_46] : memref<256x256xf32, #tpu.memory_space<vmem>>, vector<256x256xf32>
    %cst_47 = arith.constant dense<0.000000e+00> : vector<1x256xf32>
    %65 = tpu.matmul %63, %64, %cst_47 {dimension_numbers = #tpu.dot_dimension_numbers<[1], [0], [0], [1], [0, 0, 1, 1], [], []>} : vector<1x256xf32>, vector<256x256xf32>, vector<1x256xf32> -> vector<1x256xf32>
    %66 = vector.broadcast %65 : vector<1x256xf32> to vector<32x256xf32>
    %67 = arith.subf %59, %66 : vector<32x256xf32>
    %68 = arith.mulf %67, %67 : vector<32x256xf32>
    %cst_48 = arith.constant dense<0.000000e+00> : vector<256xf32>
    %69 = vector.multi_reduction <add>, %68, %cst_48 [0] : vector<32x256xf32> to vector<256xf32>
    %70 = vector.shape_cast %69 : vector<256xf32> to vector<1x256xf32>
    %c0_49 = arith.constant 0 : index
    %c0_50 = arith.constant 0 : index
    %71 = vector.load %arg7[%c0_49, %c0_50] : memref<256x256xf32, #tpu.memory_space<vmem>>, vector<256x256xf32>
    %cst_51 = arith.constant dense<0.000000e+00> : vector<1x256xf32>
    %72 = tpu.matmul %70, %71, %cst_51 {dimension_numbers = #tpu.dot_dimension_numbers<[1], [0], [0], [1], [0, 0, 1, 1], [], []>} : vector<1x256xf32>, vector<256x256xf32>, vector<1x256xf32> -> vector<1x256xf32>
    %cst_52 = arith.constant 9.99999974E-6 : f32
    %73 = vector.broadcast %cst_52 : f32 to vector<1x256xf32>
    %74 = arith.addf %72, %73 : vector<1x256xf32>
    %75 = math.rsqrt %74 : vector<1x256xf32>
    %76 = arith.mulf %60, %75 : vector<1x256xf32>
    %77 = vector.broadcast %76 : vector<1x256xf32> to vector<32x256xf32>
    %78 = arith.mulf %67, %77 : vector<32x256xf32>
    %79 = vector.broadcast %61 : vector<1x256xf32> to vector<32x256xf32>
    %80 = arith.addf %78, %79 : vector<32x256xf32>
    %81 = arith.addf %80, %18 : vector<32x256xf32>
    %cst_53 = arith.constant 0.000000e+00 : f32
    %82 = vector.broadcast %cst_53 : f32 to vector<32x256xf32>
    %83 = arith.maximumf %81, %82 : vector<32x256xf32>
    %c0_54 = arith.constant 0 : index
    %c0_55 = arith.constant 0 : index
    %84 = vector.load %arg13[%c0_54, %c0_55] : memref<32x256xf32, #tpu.memory_space<vmem>>, vector<32x256xf32>
    tpu.vector_store %arg13[%c0_54, %c0_55], %83 {strides = array<i32>} : memref<32x256xf32, #tpu.memory_space<vmem>>, vector<32x256xf32>,
    return
  }
}

</mosaic_0001>

<llo_original>
// kernel: tpu_custom_call.1
$region0: #{tpu_custom_call.1}
  #allocation0 [shape = 'u32[]', space=smem, size = 0x4, offset = 0x4, fixed_abs, tag = 'smem constant byte address 0x4 - core index']
  #allocation1 [shape = 'u32[144,128]{1,0:T(1,128)}', space=vmem, size = 0x12000, scoped, tag = 'internal scratch']
  %s0 = inlined_call_operand.vmem [shape: bf16[2,18,128], index: 0, kind: input, shape index: {}]
  %s1 = inlined_call_operand.hbm [shape: bf16[128,256], index: 1, kind: input, shape index: {}]
  %s2 = inlined_call_operand.hbm [shape: bf16[128,512], index: 2, kind: input, shape index: {}]
  %s3 = inlined_call_operand.hbm [shape: bf16[128,256], index: 3, kind: input, shape index: {}]
  %s4 = inlined_call_operand.hbm [shape: bf16[256,256], index: 4, kind: input, shape index: {}]
  %s5 = inlined_call_operand.hbm [shape: bf16[256,256], index: 5, kind: input, shape index: {}]
  %s6 = inlined_call_operand.hbm [shape: bf16[256,256], index: 6, kind: input, shape index: {}]
  %s7 = inlined_call_operand.hbm [shape: f32[256,256], index: 7, kind: input, shape index: {}]
  %s8 = inlined_call_operand.vmem [shape: f32[1,256], index: 8, kind: input, shape index: {}]
  %s9 = inlined_call_operand.vmem [shape: f32[1,256], index: 9, kind: input, shape index: {}]
  %s10 = inlined_call_operand.vmem [shape: f32[1,256], index: 10, kind: input, shape index: {}]
  %s11 = inlined_call_operand.vmem [shape: f32[1,256], index: 11, kind: input, shape index: {}]
  %s12 = inlined_call_operand.vmem [shape: f32[1,256], index: 12, kind: input, shape index: {}]
  %s13 = inlined_call_operand.hbm [shape: f32[32,256], index: 13, kind: output, shape index: {}]
  %s14 = sld [smem:[#allocation0]]
  $region90: #{tpu_custom_call.1} parent=0
    _
  %s16 = ssub.s32 1, %s14
  %s17 = scalar_select 0, %s16, %s14
  $region1: #{tpu_custom_call.1} parent=0
    #allocation2 [shape = 'u8[65536]{0}', space=vmem, size = 0x10000, scoped, tag = 'input window, operand 1, single buffered']
    #allocation3 [shape = 's32[1]{0}', space=sflag, size = 0x4, scoped, tag = 'scoped memory for tpu_custom_call.1']
    #allocation4 [shape = 's32[1]{0}', space=sflag, size = 0x4, scoped, tag = 'scoped memory for tpu_custom_call.1']
    #allocation5 [shape = 'u8[131072]{0}', space=vmem, size = 0x20000, scoped, tag = 'input window, operand 2, single buffered']
    #allocation6 [shape = 's32[1]{0}', space=sflag, size = 0x4, scoped, tag = 'scoped memory for tpu_custom_call.1']
    #allocation7 [shape = 'u8[65536]{0}', space=vmem, size = 0x10000, scoped, tag = 'input window, operand 3, single buffered']
    #allocation8 [shape = 'u8[131072]{0}', space=vmem, size = 0x20000, scoped, tag = 'input window, operand 4, single buffered']
    #allocation9 [shape = 's32[1]{0}', space=sflag, size = 0x4, scoped, tag = 'scoped memory for tpu_custom_call.1']
    #allocation10 [shape = 'u8[131072]{0}', space=vmem, size = 0x20000, scoped, tag = 'input window, operand 5, single buffered']
    #allocation11 [shape = 'u8[131072]{0}', space=vmem, size = 0x20000, scoped, tag = 'input window, operand 6, single buffered']
    #allocation12 [shape = 's32[1]{0}', space=sflag, size = 0x4, scoped, tag = 'scoped memory for tpu_custom_call.1']
    #allocation13 [shape = 'u8[262144]{0}', space=vmem, size = 0x40000, scoped, tag = 'input window, operand 7, single buffered']
    #allocation14 [shape = 'u8[32768]{0}', space=vmem, size = 0x8000, scoped, tag = 'output window, operand 0, single buffered']
    %18 = vsyncpa [#allocation3], 0
    %19 = vsyncpa [#allocation6], 0
    %20 = vsyncpa [#allocation9], 0
    %21 = vsyncpa [#allocation12], 0
    %22 = vsyncpa [#allocation4], 0
    // Predicated region
    $region2: #{tpu_custom_call.1} parent=1 // pred_check
      _
    $region3: #{tpu_custom_call.1} parent=1 // pred_check_branch
      %24 = sbr.rel (0) target = $region5
    $region4: #{tpu_custom_call.1} parent=1 // pred_region
      _
    $region5: #{tpu_custom_call.1} parent=1 // pred_fallthru
      _
    // Predicated region
    $region6: #{tpu_custom_call.1} parent=1 // pred_check
      _
    $region7: #{tpu_custom_call.1} parent=1 // pred_check_branch
      %26 = sbr.rel (0) target = $region9
    $region8: #{tpu_custom_call.1} parent=1 // pred_region
      %s28 = ssub.s32 2048, 2048
      %29 = vsyncadd [#allocation3], %s28
      %s30 = sshll.u32 [#allocation2], 4
      %s31 = int_to_ptr.vmem [resolvable:$true] %s30
      %36 = dma.hbm_to_vmem [thread:$0]  %s1, 2048, %s31, [#allocation3], 128, 128, 8
    $region9: #{tpu_custom_call.1} parent=1 // pred_fallthru
      _
    // Predicated region
    $region10: #{tpu_custom_call.1} parent=1 // pred_check
      _
    $region11: #{tpu_custom_call.1} parent=1 // pred_check_branch
      %38 = sbr.rel (0) target = $region13
    $region12: #{tpu_custom_call.1} parent=1 // pred_region
      %s40 = ssub.s32 4096, 4096
      %41 = vsyncadd [#allocation6], %s40
      %s42 = sshll.u32 [#allocation5], 4
      %s43 = int_to_ptr.vmem [resolvable:$true] %s42
      %48 = dma.hbm_to_vmem [thread:$0]  %s2, 4096, %s43, [#allocation6], 256, 256, 16
    $region13: #{tpu_custom_call.1} parent=1 // pred_fallthru
      _
    // Predicated region
    $region14: #{tpu_custom_call.1} parent=1 // pred_check
      _
    $region15: #{tpu_custom_call.1} parent=1 // pred_check_branch
      %50 = sbr.rel (0) target = $region17
    $region16: #{tpu_custom_call.1} parent=1 // pred_region
      %s52 = ssub.s32 2048, 2048
      %53 = vsyncadd [#allocation6], %s52
      %s54 = sshll.u32 [#allocation7], 4
      %s55 = int_to_ptr.vmem [resolvable:$true] %s54
      %60 = dma.hbm_to_vmem [thread:$0]  %s3, 2048, %s55, [#allocation6], 128, 128, 8
    $region17: #{tpu_custom_call.1} parent=1 // pred_fallthru
      _
    // Predicated region
    $region18: #{tpu_custom_call.1} parent=1 // pred_check
      _
    $region19: #{tpu_custom_call.1} parent=1 // pred_check_branch
      %62 = sbr.rel (0) target = $region21
    $region20: #{tpu_custom_call.1} parent=1 // pred_region
      %s64 = ssub.s32 4096, 4096
      %65 = vsyncadd [#allocation9], %s64
      %s66 = sshll.u32 [#allocation8], 4
      %s67 = int_to_ptr.vmem [resolvable:$true] %s66
      %72 = dma.hbm_to_vmem [thread:$0]  %s4, 4096, %s67, [#allocation9], 128, 128, 8
    $region21: #{tpu_custom_call.1} parent=1 // pred_fallthru
      _
    // Predicated region
    $region22: #{tpu_custom_call.1} parent=1 // pred_check
      _
    $region23: #{tpu_custom_call.1} parent=1 // pred_check_branch
      %74 = sbr.rel (0) target = $region25
    $region24: #{tpu_custom_call.1} parent=1 // pred_region
      %s76 = ssub.s32 4096, 4096
      %77 = vsyncadd [#allocation9], %s76
      %s78 = sshll.u32 [#allocation10], 4
      %s79 = int_to_ptr.vmem [resolvable:$true] %s78
      %84 = dma.hbm_to_vmem [thread:$0]  %s5, 4096, %s79, [#allocation9], 128, 128, 8
    $region25: #{tpu_custom_call.1} parent=1 // pred_fallthru
      _
    // Predicated region
    $region26: #{tpu_custom_call.1} parent=1 // pred_check
      _
    $region27: #{tpu_custom_call.1} parent=1 // pred_check_branch
      %86 = sbr.rel (0) target = $region29
    $region28: #{tpu_custom_call.1} parent=1 // pred_region
      %s88 = ssub.s32 4096, 4096
      %89 = vsyncadd [#allocation12], %s88
      %s90 = sshll.u32 [#allocation11], 4
      %s91 = int_to_ptr.vmem [resolvable:$true] %s90
      %96 = dma.hbm_to_vmem [thread:$0]  %s6, 4096, %s91, [#allocation12], 128, 128, 8
    $region29: #{tpu_custom_call.1} parent=1 // pred_fallthru
      _
    // Predicated region
    $region30: #{tpu_custom_call.1} parent=1 // pred_check
      _
    $region31: #{tpu_custom_call.1} parent=1 // pred_check_branch
      %98 = sbr.rel (0) target = $region33
    $region32: #{tpu_custom_call.1} parent=1 // pred_region
      %s100 = ssub.s32 8192, 8192
      %101 = vsyncadd [#allocation12], %s100
      %s102 = sshll.u32 [#allocation13], 4
      %s103 = int_to_ptr.vmem [resolvable:$true] %s102
      %108 = dma.hbm_to_vmem [thread:$0]  %s7, 8192, %s103, [#allocation12], 256, 256, 16
    $region33: #{tpu_custom_call.1} parent=1 // pred_fallthru
      _
    // Predicated region
    $region34: #{tpu_custom_call.1} parent=1 // pred_check
      _
    $region35: #{tpu_custom_call.1} parent=1 // pred_check_branch
      %110 = sbr.rel (0) target = $region37
    $region36: #{tpu_custom_call.1} parent=1 // pred_region
      _
    $region37: #{tpu_custom_call.1} parent=1 // pred_fallthru
      _
    // Predicated region
    $region38: #{tpu_custom_call.1} parent=1 // pred_check
      _
    $region39: #{tpu_custom_call.1} parent=1 // pred_check_branch
      %112 = sbr.rel (0) target = $region41
    $region40: #{tpu_custom_call.1} parent=1 // pred_region
      _
    $region41: #{tpu_custom_call.1} parent=1 // pred_fallthru
      _
    // Predicated region
    $region42: #{tpu_custom_call.1} parent=1 // pred_check
      _
    $region43: #{tpu_custom_call.1} parent=1 // pred_check_branch
      %114 = sbr.rel (0) target = $region45
    $region44: #{tpu_custom_call.1} parent=1 // pred_region
      _
    $region45: #{tpu_custom_call.1} parent=1 // pred_fallthru
      _
    // Predicated region
    $region46: #{tpu_custom_call.1} parent=1 // pred_check
      _
    $region47: #{tpu_custom_call.1} parent=1 // pred_check_branch
      %116 = sbr.rel (0) target = $region49
    $region48: #{tpu_custom_call.1} parent=1 // pred_region
      _
    $region49: #{tpu_custom_call.1} parent=1 // pred_fallthru
      _
    // Predicated region
    $region50: #{tpu_custom_call.1} parent=1 // pred_check
      _
    $region51: #{tpu_custom_call.1} parent=1 // pred_check_branch
      %118 = sbr.rel (0) target = $region53
    $region52: #{tpu_custom_call.1} parent=1 // pred_region
      _
    $region53: #{tpu_custom_call.1} parent=1 // pred_fallthru
      _
    // Predicated region
    $region54: #{tpu_custom_call.1} parent=1 // pred_check
      _
    $region55: #{tpu_custom_call.1} parent=1 // pred_check_branch
      %120 = sbr.rel (0) target = $region57
    $region56: #{tpu_custom_call.1} parent=1 // pred_region
      %121 = dma.done [#allocation3], 2048
    $region57: #{tpu_custom_call.1} parent=1 // pred_fallthru
      _
    // Predicated region
    $region58: #{tpu_custom_call.1} parent=1 // pred_check
      _
    $region59: #{tpu_custom_call.1} parent=1 // pred_check_branch
      %123 = sbr.rel (0) target = $region61
    $region60: #{tpu_custom_call.1} parent=1 // pred_region
      %124 = dma.done [#allocation6], 4096
    $region61: #{tpu_custom_call.1} parent=1 // pred_fallthru
      _
    // Predicated region
    $region62: #{tpu_custom_call.1} parent=1 // pred_check
      _
    $region63: #{tpu_custom_call.1} parent=1 // pred_check_branch
      %126 = sbr.rel (0) target = $region65
    $region64: #{tpu_custom_call.1} parent=1 // pred_region
      %127 = dma.done [#allocation6], 2048
    $region65: #{tpu_custom_call.1} parent=1 // pred_fallthru
      _
    // Predicated region
    $region66: #{tpu_custom_call.1} parent=1 // pred_check
      _
    $region67: #{tpu_custom_call.1} parent=1 // pred_check_branch
      %129 = sbr.rel (0) target = $region69
    $region68: #{tpu_custom_call.1} parent=1 // pred_region
      %130 = dma.done [#allocation9], 4096
    $region69: #{tpu_custom_call.1} parent=1 // pred_fallthru
      _
    // Predicated region
    $region70: #{tpu_custom_call.1} parent=1 // pred_check
      _
    $region71: #{tpu_custom_call.1} parent=1 // pred_check_branch
      %132 = sbr.rel (0) target = $region73
    $region72: #{tpu_custom_call.1} parent=1 // pred_region
      %133 = dma.done [#allocation9], 4096
    $region73: #{tpu_custom_call.1} parent=1 // pred_fallthru
      _
    // Predicated region
    $region74: #{tpu_custom_call.1} parent=1 // pred_check
      _
    $region75: #{tpu_custom_call.1} parent=1 // pred_check_branch
      %135 = sbr.rel (0) target = $region77
    $region76: #{tpu_custom_call.1} parent=1 // pred_region
      %136 = dma.done [#allocation12], 4096
    $region77: #{tpu_custom_call.1} parent=1 // pred_fallthru
      _
    // Predicated region
    $region78: #{tpu_custom_call.1} parent=1 // pred_check
      _
    $region79: #{tpu_custom_call.1} parent=1 // pred_check_branch
      %138 = sbr.rel (0) target = $region81
    $region80: #{tpu_custom_call.1} parent=1 // pred_region
      %139 = dma.done [#allocation12], 8192
    $region81: #{tpu_custom_call.1} parent=1 // pred_fallthru
      _
    %v141 = vld [vmem:[%s0] sm:$0xf]
    %v142 = vld [vmem:[%s0 + $0x4] sm:$0xf]
    %v143 = vld [vmem:[%s0 + $0xc] sm:$0xf]
    %v144 = vld [vmem:[%s0 + $0x10] sm:$0xf]
    %v145 = vld [vmem:[#allocation2] sm:$0xff]
    %v146 = vld [vmem:[#allocation2 + $0x8] sm:$0xff]
    %v147 = vld [vmem:[#allocation2 + $0x10] sm:$0xff]
    %v148 = vld [vmem:[#allocation2 + $0x18] sm:$0xff]
    %v149 = vld [vmem:[#allocation2 + $0x20] sm:$0xff]
    %v150 = vld [vmem:[#allocation2 + $0x28] sm:$0xff]
    %v151 = vld [vmem:[#allocation2 + $0x30] sm:$0xff]
    %v152 = vld [vmem:[#allocation2 + $0x38] sm:$0xff]
    %v153 = vld [vmem:[#allocation2 + $0x40] sm:$0xff]
    %v154 = vld [vmem:[#allocation2 + $0x48] sm:$0xff]
    %v155 = vld [vmem:[#allocation2 + $0x50] sm:$0xff]
    %v156 = vld [vmem:[#allocation2 + $0x58] sm:$0xff]
    %v157 = vld [vmem:[#allocation2 + $0x60] sm:$0xff]
    %v158 = vld [vmem:[#allocation2 + $0x68] sm:$0xff]
    %v159 = vld [vmem:[#allocation2 + $0x70] sm:$0xff]
    %v160 = vld [vmem:[#allocation2 + $0x78] sm:$0xff]
    %v161 = vld [vmem:[%s0 + $0x8] sm:$0x1]
    %v162 = vld [vmem:[%s0 + $0x14] sm:$0x1]
    %vm163 = vsmask.f32 3328
    %vm164 = vsmask.f32 7440
    %vm165 = vmor %vm163, %vm164
    %v167 = vshrl.u32 %v141, 16
    %v169 = vrot.slane %v167, 4
    %v170 = vshll.u32 %v141, 16
    %v172 = vrot.slane %v170, 5
    %v173 = vor.u32 %v169, %v172
    %v174 = vrot.slane %v173, 4
    %v176 = vshll.u32 %v142, 16
    %v178 = vrot.slane %v176, 5
    %v179 = vsel %vm165, %v174, %v178
    %v180 = vshrl.u32 %v142, 16
    %v182 = vrot.slane %v180, 4
    %v183 = vor.u32 %v182, %v178
    %v184 = vrot.slane %v183, 4
    %v186 = vshll.u32 %v161, 16
    %v188 = vrot.slane %v186, 5
    %v189 = vsel %vm165, %v184, %v188
    %v191 = vshrl.u32 %v143, 16
    %v193 = vrot.slane %v191, 4
    %v194 = vshll.u32 %v143, 16
    %v196 = vrot.slane %v194, 5
    %v197 = vor.u32 %v193, %v196
    %v198 = vrot.slane %v197, 4
    %v200 = vshll.u32 %v144, 16
    %v202 = vrot.slane %v200, 5
    %v203 = vsel %vm165, %v198, %v202
    %v204 = vshrl.u32 %v144, 16
    %v206 = vrot.slane %v204, 4
    %v207 = vor.u32 %v206, %v202
    %v208 = vrot.slane %v207, 4
    %v210 = vshll.u32 %v162, 16
    %v212 = vrot.slane %v210, 5
    %v213 = vsel %vm165, %v208, %v212
    %v214 = vld [vmem:[#allocation5] sm:$0xff]
    %v215 = vld [vmem:[#allocation5 + $0x8] sm:$0xff]
    %v216 = vld [vmem:[#allocation5 + $0x10] sm:$0xff]
    %v217 = vld [vmem:[#allocation5 + $0x18] sm:$0xff]
    %v218 = vld [vmem:[#allocation5 + $0x20] sm:$0xff]
    %v219 = vld [vmem:[#allocation5 + $0x28] sm:$0xff]
    %v220 = vld [vmem:[#allocation5 + $0x30] sm:$0xff]
    %v221 = vld [vmem:[#allocation5 + $0x38] sm:$0xff]
    %v222 = vld [vmem:[#allocation5 + $0x40] sm:$0xff]
    %v223 = vld [vmem:[#allocation5 + $0x48] sm:$0xff]
    %v224 = vld [vmem:[#allocation5 + $0x50] sm:$0xff]
    %v225 = vld [vmem:[#allocation5 + $0x58] sm:$0xff]
    %v226 = vld [vmem:[#allocation5 + $0x60] sm:$0xff]
    %v227 = vld [vmem:[#allocation5 + $0x68] sm:$0xff]
    %v228 = vld [vmem:[#allocation5 + $0x70] sm:$0xff]
    %v229 = vld [vmem:[#allocation5 + $0x78] sm:$0xff]
    %v230 = vld [vmem:[#allocation5 + $0x80] sm:$0xff]
    %v231 = vld [vmem:[#allocation5 + $0x88] sm:$0xff]
    %v232 = vld [vmem:[#allocation5 + $0x90] sm:$0xff]
    %v233 = vld [vmem:[#allocation5 + $0x98] sm:$0xff]
    %v234 = vld [vmem:[#allocation5 + $0xa0] sm:$0xff]
    %v235 = vld [vmem:[#allocation5 + $0xa8] sm:$0xff]
    %v236 = vld [vmem:[#allocation5 + $0xb0] sm:$0xff]
    %v237 = vld [vmem:[#allocation5 + $0xb8] sm:$0xff]
    %v238 = vld [vmem:[#allocation5 + $0xc0] sm:$0xff]
    %v239 = vld [vmem:[#allocation5 + $0xc8] sm:$0xff]
    %v240 = vld [vmem:[#allocation5 + $0xd0] sm:$0xff]
    %v241 = vld [vmem:[#allocation5 + $0xd8] sm:$0xff]
    %v242 = vld [vmem:[#allocation5 + $0xe0] sm:$0xff]
    %v243 = vld [vmem:[#allocation5 + $0xe8] sm:$0xff]
    %v244 = vld [vmem:[#allocation5 + $0xf0] sm:$0xff]
    %v245 = vld [vmem:[#allocation5 + $0xf8] sm:$0xff]
    %v246 = vunpack.c.l.b16 %v179
    %v247 = vunpack.c.l.b16 %v189
    %v248 = vunpack.c.l.b16 %v203
    %v249 = vunpack.c.l.b16 %v213
    %v250 = vpack.c.b16 %v247, %v246
    %v251 = vpack.c.b16 %v249, %v248
    %v286 = vunpack.c.l.b16 %v214
    %v287 = vunpack.c.h.b16 %v214
    %v288 = vunpack.c.l.b16 %v215
    %v289 = vunpack.c.h.b16 %v215
    %v290 = vunpack.c.l.b16 %v216
    %v291 = vunpack.c.h.b16 %v216
    %v292 = vunpack.c.l.b16 %v217
    %v293 = vunpack.c.h.b16 %v217
    %v294 = vunpack.c.l.b16 %v218
    %v295 = vunpack.c.h.b16 %v218
    %v296 = vunpack.c.l.b16 %v219
    %v297 = vunpack.c.h.b16 %v219
    %v298 = vunpack.c.l.b16 %v220
    %v299 = vunpack.c.h.b16 %v220
    %v300 = vunpack.c.l.b16 %v221
    %v301 = vunpack.c.h.b16 %v221
    %v302 = vunpack.c.l.b16 %v222
    %v303 = vunpack.c.h.b16 %v222
    %v304 = vunpack.c.l.b16 %v223
    %v305 = vunpack.c.h.b16 %v223
    %v306 = vunpack.c.l.b16 %v224
    %v307 = vunpack.c.h.b16 %v224
    %v308 = vunpack.c.l.b16 %v225
    %v309 = vunpack.c.h.b16 %v225
    %v310 = vunpack.c.l.b16 %v226
    %v311 = vunpack.c.h.b16 %v226
    %v312 = vunpack.c.l.b16 %v227
    %v313 = vunpack.c.h.b16 %v227
    %v314 = vunpack.c.l.b16 %v228
    %v315 = vunpack.c.h.b16 %v228
    %v316 = vunpack.c.l.b16 %v229
    %v317 = vunpack.c.h.b16 %v229
    %v318 = vunpack.c.l.b16 %v230
    %v319 = vunpack.c.h.b16 %v230
    %v320 = vunpack.c.l.b16 %v231
    %v321 = vunpack.c.h.b16 %v231
    %v322 = vunpack.c.l.b16 %v232
    %v323 = vunpack.c.h.b16 %v232
    %v324 = vunpack.c.l.b16 %v233
    %v325 = vunpack.c.h.b16 %v233
    %v326 = vunpack.c.l.b16 %v234
    %v327 = vunpack.c.h.b16 %v234
    %v328 = vunpack.c.l.b16 %v235
    %v329 = vunpack.c.h.b16 %v235
    %v330 = vunpack.c.l.b16 %v236
    %v331 = vunpack.c.h.b16 %v236
    %v332 = vunpack.c.l.b16 %v237
    %v333 = vunpack.c.h.b16 %v237
    %v334 = vunpack.c.l.b16 %v238
    %v335 = vunpack.c.h.b16 %v238
    %v336 = vunpack.c.l.b16 %v239
    %v337 = vunpack.c.h.b16 %v239
    %v338 = vunpack.c.l.b16 %v240
    %v339 = vunpack.c.h.b16 %v240
    %v340 = vunpack.c.l.b16 %v241
    %v341 = vunpack.c.h.b16 %v241
    %v342 = vunpack.c.l.b16 %v242
    %v343 = vunpack.c.h.b16 %v242
    %v344 = vunpack.c.l.b16 %v243
    %v345 = vunpack.c.h.b16 %v243
    %v346 = vunpack.c.l.b16 %v244
    %v347 = vunpack.c.h.b16 %v244
    %v348 = vunpack.c.l.b16 %v245
    %v349 = vunpack.c.h.b16 %v245
    %v350 = vpack.c.b16 %v290, %v286
    %v351 = vpack.c.b16 %v291, %v287
    %v352 = vpack.c.b16 %v292, %v288
    %v353 = vpack.c.b16 %v293, %v289
    %v354 = vpack.c.b16 %v298, %v294
    %v355 = vpack.c.b16 %v299, %v295
    %v356 = vpack.c.b16 %v300, %v296
    %v357 = vpack.c.b16 %v301, %v297
    %v358 = vpack.c.b16 %v306, %v302
    %v359 = vpack.c.b16 %v307, %v303
    %v360 = vpack.c.b16 %v308, %v304
    %v361 = vpack.c.b16 %v309, %v305
    %v362 = vpack.c.b16 %v314, %v310
    %v363 = vpack.c.b16 %v315, %v311
    %v364 = vpack.c.b16 %v316, %v312
    %v365 = vpack.c.b16 %v317, %v313
    %v366 = vpack.c.b16 %v322, %v318
    %v367 = vpack.c.b16 %v323, %v319
    %v368 = vpack.c.b16 %v324, %v320
    %v369 = vpack.c.b16 %v325, %v321
    %v370 = vpack.c.b16 %v330, %v326
    %v371 = vpack.c.b16 %v331, %v327
    %v372 = vpack.c.b16 %v332, %v328
    %v373 = vpack.c.b16 %v333, %v329
    %v374 = vpack.c.b16 %v338, %v334
    %v375 = vpack.c.b16 %v339, %v335
    %v376 = vpack.c.b16 %v340, %v336
    %v377 = vpack.c.b16 %v341, %v337
    %v378 = vpack.c.b16 %v346, %v342
    %v379 = vpack.c.b16 %v347, %v343
    %v380 = vpack.c.b16 %v348, %v344
    %v381 = vpack.c.b16 %v349, %v345
    %414 = vmatprep.subr.bf16.mxu0 %v351
    %415 = vmatpush1.bf16.msra.mxu0 %v350
    %416 = vmatprep.subr.bf16.mxu0 %v355
    %417 = vmatpush1.bf16.msra.mxu0 %v354
    %418 = vmatprep.subr.bf16.mxu0 %v359
    %419 = vmatpush1.bf16.msra.mxu0 %v358
    %420 = vmatprep.subr.bf16.mxu0 %v363
    %421 = vmatpush1.bf16.msra.mxu0 %v362
    %422 = vmatprep.subr.bf16.mxu0 %v367
    %423 = vmatpush1.bf16.msra.mxu0 %v366
    %424 = vmatprep.subr.bf16.mxu0 %v371
    %425 = vmatpush1.bf16.msra.mxu0 %v370
    %426 = vmatprep.subr.bf16.mxu0 %v375
    %427 = vmatpush1.bf16.msra.mxu0 %v374
    %428 = vmatprep.subr.bf16.mxu0 %v379
    %429 = vmatpush1.bf16.msra.mxu0 %v378
    %430 = vmatprep.subr.bf16.mxu0 0
    %431 = vmatpush1.bf16.msra.mxu0 0
    %432 = vmatprep.subr.bf16.mxu0 0
    %433 = vmatpush1.bf16.msra.mxu0 0
    %434 = vmatprep.subr.bf16.mxu0 0
    %435 = vmatpush1.bf16.msra.mxu0 0
    %436 = vmatprep.subr.bf16.mxu0 0
    %437 = vmatpush1.bf16.msra.mxu0 0
    %438 = vmatprep.subr.bf16.mxu0 0
    %439 = vmatpush1.bf16.msra.mxu0 0
    %440 = vmatprep.subr.bf16.mxu0 0
    %441 = vmatpush1.bf16.msra.mxu0 0
    %442 = vmatprep.subr.bf16.mxu0 0
    %443 = vmatpush1.bf16.msra.mxu0 0
    %444 = vmatprep.subr.bf16.mxu0 0
    %445 = vmatpush1.bf16.msra.mxu0 0
    %446 = vmatprep.mubr.bf16.mxu0 0
    %447 = vmatmul.mubr.bf16.gmra.mrb[0].mxu0 %v250
    %v448 = vpop.f32.mrb[0].mxu0
    %v449 = vadd.f32 0.0, %v448
    %v450 = vpop.f32.mrb[0].mxu0
    %v451 = vadd.f32 0.0, %v450
    %v452 = vpop.f32.mrb[0].mxu0
    %v453 = vadd.f32 0.0, %v452
    %v454 = vpop.f32.mrb[0].mxu0
    %v455 = vadd.f32 0.0, %v454
    %456 = vmatprep.mubr.bf16.mxu0 0
    %457 = vmatmul.mubr.bf16.gmra.mrb[0].mxu0 %v251
    %v458 = vpop.f32.mrb[0].mxu0
    %v459 = vadd.f32 0.0, %v458
    %v460 = vpop.f32.mrb[0].mxu0
    %v461 = vadd.f32 0.0, %v460
    %v462 = vpop.f32.mrb[0].mxu0
    %v463 = vadd.f32 0.0, %v462
    %v464 = vpop.f32.mrb[0].mxu0
    %v465 = vadd.f32 0.0, %v464
    %466 = vdwg.mxu0
    %467 = vmatprep.subr.bf16.mxu0 %v353
    %468 = vmatpush1.bf16.msra.mxu0 %v352
    %469 = vmatprep.subr.bf16.mxu0 %v357
    %470 = vmatpush1.bf16.msra.mxu0 %v356
    %471 = vmatprep.subr.bf16.mxu0 %v361
    %472 = vmatpush1.bf16.msra.mxu0 %v360
    %473 = vmatprep.subr.bf16.mxu0 %v365
    %474 = vmatpush1.bf16.msra.mxu0 %v364
    %475 = vmatprep.subr.bf16.mxu0 %v369
    %476 = vmatpush1.bf16.msra.mxu0 %v368
    %477 = vmatprep.subr.bf16.mxu0 %v373
    %478 = vmatpush1.bf16.msra.mxu0 %v372
    %479 = vmatprep.subr.bf16.mxu0 %v377
    %480 = vmatpush1.bf16.msra.mxu0 %v376
    %481 = vmatprep.subr.bf16.mxu0 %v381
    %482 = vmatpush1.bf16.msra.mxu0 %v380
    %483 = vmatprep.subr.bf16.mxu0 0
    %484 = vmatpush1.bf16.msra.mxu0 0
    %485 = vmatprep.subr.bf16.mxu0 0
    %486 = vmatpush1.bf16.msra.mxu0 0
    %487 = vmatprep.subr.bf16.mxu0 0
    %488 = vmatpush1.bf16.msra.mxu0 0
    %489 = vmatprep.subr.bf16.mxu0 0
    %490 = vmatpush1.bf16.msra.mxu0 0
    %491 = vmatprep.subr.bf16.mxu0 0
    %492 = vmatpush1.bf16.msra.mxu0 0
    %493 = vmatprep.subr.bf16.mxu0 0
    %494 = vmatpush1.bf16.msra.mxu0 0
    %495 = vmatprep.subr.bf16.mxu0 0
    %496 = vmatpush1.bf16.msra.mxu0 0
    %497 = vmatprep.subr.bf16.mxu0 0
    %498 = vmatpush1.bf16.msra.mxu0 0
    %499 = vmatprep.mubr.bf16.mxu0 0
    %500 = vmatmul.mubr.bf16.gmra.mrb[0].mxu0 %v250
    %v501 = vpop.f32.mrb[0].mxu0
    %v502 = vadd.f32 0.0, %v501
    %v503 = vpop.f32.mrb[0].mxu0
    %v504 = vadd.f32 0.0, %v503
    %v505 = vpop.f32.mrb[0].mxu0
    %v506 = vadd.f32 0.0, %v505
    %v507 = vpop.f32.mrb[0].mxu0
    %v508 = vadd.f32 0.0, %v507
    %509 = vmatprep.mubr.bf16.mxu0 0
    %510 = vmatmul.mubr.bf16.gmra.mrb[0].mxu0 %v251
    %v511 = vpop.f32.mrb[0].mxu0
    %v512 = vadd.f32 0.0, %v511
    %v513 = vpop.f32.mrb[0].mxu0
    %v514 = vadd.f32 0.0, %v513
    %v515 = vpop.f32.mrb[0].mxu0
    %v516 = vadd.f32 0.0, %v515
    %v517 = vpop.f32.mrb[0].mxu0
    %v518 = vadd.f32 0.0, %v517
    %519 = vdwg.mxu0
    %v524 = vunpack.c.l.b16 %v141
    %v525 = vunpack.c.l.b16 %v142
    %v526 = vunpack.c.l.b16 %v143
    %v527 = vunpack.c.l.b16 %v144
    %v528 = vpack.c.b16 %v525, %v524
    %v529 = vpack.c.b16 %v527, %v526
    %v548 = vunpack.c.l.b16 %v145
    %v549 = vunpack.c.h.b16 %v145
    %v550 = vunpack.c.l.b16 %v146
    %v551 = vunpack.c.h.b16 %v146
    %v552 = vunpack.c.l.b16 %v147
    %v553 = vunpack.c.h.b16 %v147
    %v554 = vunpack.c.l.b16 %v148
    %v555 = vunpack.c.h.b16 %v148
    %v556 = vunpack.c.l.b16 %v149
    %v557 = vunpack.c.h.b16 %v149
    %v558 = vunpack.c.l.b16 %v150
    %v559 = vunpack.c.h.b16 %v150
    %v560 = vunpack.c.l.b16 %v151
    %v561 = vunpack.c.h.b16 %v151
    %v562 = vunpack.c.l.b16 %v152
    %v563 = vunpack.c.h.b16 %v152
    %v564 = vunpack.c.l.b16 %v153
    %v565 = vunpack.c.h.b16 %v153
    %v566 = vunpack.c.l.b16 %v154
    %v567 = vunpack.c.h.b16 %v154
    %v568 = vunpack.c.l.b16 %v155
    %v569 = vunpack.c.h.b16 %v155
    %v570 = vunpack.c.l.b16 %v156
    %v571 = vunpack.c.h.b16 %v156
    %v572 = vunpack.c.l.b16 %v157
    %v573 = vunpack.c.h.b16 %v157
    %v574 = vunpack.c.l.b16 %v158
    %v575 = vunpack.c.h.b16 %v158
    %v576 = vunpack.c.l.b16 %v159
    %v577 = vunpack.c.h.b16 %v159
    %v578 = vunpack.c.l.b16 %v160
    %v579 = vunpack.c.h.b16 %v160
    %v580 = vpack.c.b16 %v550, %v548
    %v581 = vpack.c.b16 %v551, %v549
    %v582 = vpack.c.b16 %v554, %v552
    %v583 = vpack.c.b16 %v555, %v553
    %v584 = vpack.c.b16 %v558, %v556
    %v585 = vpack.c.b16 %v559, %v557
    %v586 = vpack.c.b16 %v562, %v560
    %v587 = vpack.c.b16 %v563, %v561
    %v588 = vpack.c.b16 %v566, %v564
    %v589 = vpack.c.b16 %v567, %v565
    %v590 = vpack.c.b16 %v570, %v568
    %v591 = vpack.c.b16 %v571, %v569
    %v592 = vpack.c.b16 %v574, %v572
    %v593 = vpack.c.b16 %v575, %v573
    %v594 = vpack.c.b16 %v578, %v576
    %v595 = vpack.c.b16 %v579, %v577
    %612 = vmatprep.subr.bf16.mxu0 %v581
    %613 = vmatpush1.bf16.msra.mxu0 %v580
    %614 = vmatprep.subr.bf16.mxu0 %v583
    %615 = vmatpush1.bf16.msra.mxu0 %v582
    %616 = vmatprep.subr.bf16.mxu0 %v585
    %617 = vmatpush1.bf16.msra.mxu0 %v584
    %618 = vmatprep.subr.bf16.mxu0 %v587
    %619 = vmatpush1.bf16.msra.mxu0 %v586
    %620 = vmatprep.subr.bf16.mxu0 %v589
    %621 = vmatpush1.bf16.msra.mxu0 %v588
    %622 = vmatprep.subr.bf16.mxu0 %v591
    %623 = vmatpush1.bf16.msra.mxu0 %v590
    %624 = vmatprep.subr.bf16.mxu0 %v593
    %625 = vmatpush1.bf16.msra.mxu0 %v592
    %626 = vmatprep.subr.bf16.mxu0 %v595
    %627 = vmatpush1.bf16.msra.mxu0 %v594
    %628 = vmatprep.subr.bf16.mxu0 0
    %629 = vmatpush1.bf16.msra.mxu0 0
    %630 = vmatprep.subr.bf16.mxu0 0
    %631 = vmatpush1.bf16.msra.mxu0 0
    %632 = vmatprep.subr.bf16.mxu0 0
    %633 = vmatpush1.bf16.msra.mxu0 0
    %634 = vmatprep.subr.bf16.mxu0 0
    %635 = vmatpush1.bf16.msra.mxu0 0
    %636 = vmatprep.subr.bf16.mxu0 0
    %637 = vmatpush1.bf16.msra.mxu0 0
    %638 = vmatprep.subr.bf16.mxu0 0
    %639 = vmatpush1.bf16.msra.mxu0 0
    %640 = vmatprep.subr.bf16.mxu0 0
    %641 = vmatpush1.bf16.msra.mxu0 0
    %642 = vmatprep.subr.bf16.mxu0 0
    %643 = vmatpush1.bf16.msra.mxu0 0
    %644 = vmatprep.mubr.bf16.mxu0 0
    %645 = vmatmul.mubr.bf16.gmra.mrb[0].mxu0 %v528
    %v646 = vpop.f32.mrb[0].mxu0
    %v647 = vadd.f32 %v449, %v646
    %v648 = vpop.f32.mrb[0].mxu0
    %v649 = vadd.f32 %v451, %v648
    %v650 = vpop.f32.mrb[0].mxu0
    %v651 = vadd.f32 %v453, %v650
    %v652 = vpop.f32.mrb[0].mxu0
    %v653 = vadd.f32 %v455, %v652
    %654 = vmatprep.mubr.bf16.mxu0 0
    %655 = vmatmul.mubr.bf16.gmra.mrb[0].mxu0 %v529
    %v656 = vpop.f32.mrb[0].mxu0
    %v657 = vadd.f32 %v459, %v656
    %v658 = vpop.f32.mrb[0].mxu0
    %v659 = vadd.f32 %v461, %v658
    %v660 = vpop.f32.mrb[0].mxu0
    %v661 = vadd.f32 %v463, %v660
    %v662 = vpop.f32.mrb[0].mxu0
    %v663 = vadd.f32 %v465, %v662
    %664 = vdwg.mxu0
    %v665 = vld [vmem:[%s0] sm:$0xe]
    %v666 = vld [vmem:[%s0 + $0xc] sm:$0xe]
    %vm671 = vcmask 1042432
    %vm672 = vcmask 1046532
    %vm673 = vmor %vm671, %vm672
    %v674 = vrot.slane %v665, 5
    %v675 = vrot.slane %v674, 4
    %v676 = vrot.slane %v142, 5
    %v677 = vsel %vm673, %v675, %v676
    %v678 = vrot.slane %v676, 4
    %v679 = vrot.slane %v161, 5
    %v680 = vsel %vm673, %v678, %v679
    %v681 = vrot.slane %v666, 5
    %v682 = vrot.slane %v681, 4
    %v683 = vrot.slane %v144, 5
    %v684 = vsel %vm673, %v682, %v683
    %v685 = vrot.slane %v683, 4
    %v686 = vrot.slane %v162, 5
    %v687 = vsel %vm673, %v685, %v686
    %v688 = vld [vmem:[#allocation7] sm:$0xff]
    %v689 = vld [vmem:[#allocation7 + $0x8] sm:$0xff]
    %v690 = vld [vmem:[#allocation7 + $0x10] sm:$0xff]
    %v691 = vld [vmem:[#allocation7 + $0x18] sm:$0xff]
    %v692 = vld [vmem:[#allocation7 + $0x20] sm:$0xff]
    %v693 = vld [vmem:[#allocation7 + $0x28] sm:$0xff]
    %v694 = vld [vmem:[#allocation7 + $0x30] sm:$0xff]
    %v695 = vld [vmem:[#allocation7 + $0x38] sm:$0xff]
    %v696 = vld [vmem:[#allocation7 + $0x40] sm:$0xff]
    %v697 = vld [vmem:[#allocation7 + $0x48] sm:$0xff]
    %v698 = vld [vmem:[#allocation7 + $0x50] sm:$0xff]
    %v699 = vld [vmem:[#allocation7 + $0x58] sm:$0xff]
    %v700 = vld [vmem:[#allocation7 + $0x60] sm:$0xff]
    %v701 = vld [vmem:[#allocation7 + $0x68] sm:$0xff]
    %v702 = vld [vmem:[#allocation7 + $0x70] sm:$0xff]
    %v703 = vld [vmem:[#allocation7 + $0x78] sm:$0xff]
    %v704 = vunpack.c.l.b16 %v677
    %v705 = vunpack.c.l.b16 %v680
    %v706 = vunpack.c.l.b16 %v684
    %v707 = vunpack.c.l.b16 %v687
    %v708 = vpack.c.b16 %v705, %v704
    %v709 = vpack.c.b16 %v707, %v706
    %v728 = vunpack.c.l.b16 %v688
    %v729 = vunpack.c.h.b16 %v688
    %v730 = vunpack.c.l.b16 %v689
    %v731 = vunpack.c.h.b16 %v689
    %v732 = vunpack.c.l.b16 %v690
    %v733 = vunpack.c.h.b16 %v690
    %v734 = vunpack.c.l.b16 %v691
    %v735 = vunpack.c.h.b16 %v691
    %v736 = vunpack.c.l.b16 %v692
    %v737 = vunpack.c.h.b16 %v692
    %v738 = vunpack.c.l.b16 %v693
    %v739 = vunpack.c.h.b16 %v693
    %v740 = vunpack.c.l.b16 %v694
    %v741 = vunpack.c.h.b16 %v694
    %v742 = vunpack.c.l.b16 %v695
    %v743 = vunpack.c.h.b16 %v695
    %v744 = vunpack.c.l.b16 %v696
    %v745 = vunpack.c.h.b16 %v696
    %v746 = vunpack.c.l.b16 %v697
    %v747 = vunpack.c.h.b16 %v697
    %v748 = vunpack.c.l.b16 %v698
    %v749 = vunpack.c.h.b16 %v698
    %v750 = vunpack.c.l.b16 %v699
    %v751 = vunpack.c.h.b16 %v699
    %v752 = vunpack.c.l.b16 %v700
    %v753 = vunpack.c.h.b16 %v700
    %v754 = vunpack.c.l.b16 %v701
    %v755 = vunpack.c.h.b16 %v701
    %v756 = vunpack.c.l.b16 %v702
    %v757 = vunpack.c.h.b16 %v702
    %v758 = vunpack.c.l.b16 %v703
    %v759 = vunpack.c.h.b16 %v703
    %v760 = vpack.c.b16 %v730, %v728
    %v761 = vpack.c.b16 %v731, %v729
    %v762 = vpack.c.b16 %v734, %v732
    %v763 = vpack.c.b16 %v735, %v733
    %v764 = vpack.c.b16 %v738, %v736
    %v765 = vpack.c.b16 %v739, %v737
    %v766 = vpack.c.b16 %v742, %v740
    %v767 = vpack.c.b16 %v743, %v741
    %v768 = vpack.c.b16 %v746, %v744
    %v769 = vpack.c.b16 %v747, %v745
    %v770 = vpack.c.b16 %v750, %v748
    %v771 = vpack.c.b16 %v751, %v749
    %v772 = vpack.c.b16 %v754, %v752
    %v773 = vpack.c.b16 %v755, %v753
    %v774 = vpack.c.b16 %v758, %v756
    %v775 = vpack.c.b16 %v759, %v757
    %792 = vmatprep.subr.bf16.mxu0 %v761
    %793 = vmatpush1.bf16.msra.mxu0 %v760
    %794 = vmatprep.subr.bf16.mxu0 %v763
    %795 = vmatpush1.bf16.msra.mxu0 %v762
    %796 = vmatprep.subr.bf16.mxu0 %v765
    %797 = vmatpush1.bf16.msra.mxu0 %v764
    %798 = vmatprep.subr.bf16.mxu0 %v767
    %799 = vmatpush1.bf16.msra.mxu0 %v766
    %800 = vmatprep.subr.bf16.mxu0 %v769
    %801 = vmatpush1.bf16.msra.mxu0 %v768
    %802 = vmatprep.subr.bf16.mxu0 %v771
    %803 = vmatpush1.bf16.msra.mxu0 %v770
    %804 = vmatprep.subr.bf16.mxu0 %v773
    %805 = vmatpush1.bf16.msra.mxu0 %v772
    %806 = vmatprep.subr.bf16.mxu0 %v775
    %807 = vmatpush1.bf16.msra.mxu0 %v774
    %808 = vmatprep.subr.bf16.mxu0 0
    %809 = vmatpush1.bf16.msra.mxu0 0
    %810 = vmatprep.subr.bf16.mxu0 0
    %811 = vmatpush1.bf16.msra.mxu0 0
    %812 = vmatprep.subr.bf16.mxu0 0
    %813 = vmatpush1.bf16.msra.mxu0 0
    %814 = vmatprep.subr.bf16.mxu0 0
    %815 = vmatpush1.bf16.msra.mxu0 0
    %816 = vmatprep.subr.bf16.mxu0 0
    %817 = vmatpush1.bf16.msra.mxu0 0
    %818 = vmatprep.subr.bf16.mxu0 0
    %819 = vmatpush1.bf16.msra.mxu0 0
    %820 = vmatprep.subr.bf16.mxu0 0
    %821 = vmatpush1.bf16.msra.mxu0 0
    %822 = vmatprep.subr.bf16.mxu0 0
    %823 = vmatpush1.bf16.msra.mxu0 0
    %824 = vmatprep.mubr.bf16.mxu0 0
    %825 = vmatmul.mubr.bf16.gmra.mrb[0].mxu0 %v708
    %v826 = vpop.f32.mrb[0].mxu0
    %v827 = vadd.f32 0.0, %v826
    %v828 = vpop.f32.mrb[0].mxu0
    %v829 = vadd.f32 0.0, %v828
    %v830 = vpop.f32.mrb[0].mxu0
    %v831 = vadd.f32 0.0, %v830
    %v832 = vpop.f32.mrb[0].mxu0
    %v833 = vadd.f32 0.0, %v832
    %834 = vmatprep.mubr.bf16.mxu0 0
    %835 = vmatmul.mubr.bf16.gmra.mrb[0].mxu0 %v709
    %v836 = vpop.f32.mrb[0].mxu0
    %v837 = vadd.f32 0.0, %v836
    %v838 = vpop.f32.mrb[0].mxu0
    %v839 = vadd.f32 0.0, %v838
    %v840 = vpop.f32.mrb[0].mxu0
    %v841 = vadd.f32 0.0, %v840
    %v842 = vpop.f32.mrb[0].mxu0
    %v843 = vadd.f32 0.0, %v842
    %844 = vdwg.mxu0
    %v845 = vadd.f32 %v647, %v827
    %v846 = vadd.f32 %v649, %v829
    %v847 = vadd.f32 %v651, %v831
    %v848 = vadd.f32 %v653, %v833
    %v849 = vadd.f32 %v657, %v837
    %v850 = vadd.f32 %v659, %v839
    %v851 = vadd.f32 %v661, %v841
    %v852 = vadd.f32 %v663, %v843
    %v853 = vld [vmem:[%s12] sm:$0x3]
    %v855 = vlaneseq
    %v856 = vshrl.u32 %v855, 7
    %v857 = vsub.s32 0, %v856
    %v858 = vrot.slane %v853, %v857
    %v859 = vlaneseq
    %v860 = vshrl.u32 %v859, 7
    %v861 = vsub.s32 1, %v860
    %v862 = vrot.slane %v853, %v861
    %v865 = vadd.f32 %v502, %v858
    %v866 = vadd.f32 %v504, %v862
    %v867 = vadd.f32 %v506, %v858
    %v868 = vadd.f32 %v508, %v862
    %v869 = vadd.f32 %v512, %v858
    %v870 = vadd.f32 %v514, %v862
    %v871 = vadd.f32 %v516, %v858
    %v872 = vadd.f32 %v518, %v862
    %v873 = vld [vmem:[%s8] sm:$0x3]
    %v874 = vld [vmem:[%s9] sm:$0x3]
    %v875 = vadd.f32 %v845, %v847
    %v876 = vadd.f32 %v875, %v849
    %v877 = vadd.f32 %v876, %v851
    %v878 = vrot.slane %v877, 4
    %v879 = vadd.f32 %v877, %v878
    %v880 = vrot.slane %v879, 2
    %v881 = vadd.f32 %v879, %v880
    %v882 = vrot.slane %v881, 1
    %v883 = vadd.f32 %v881, %v882
    %v884 = vadd.f32 %v846, %v848
    %v885 = vadd.f32 %v884, %v850
    %v886 = vadd.f32 %v885, %v852
    %v887 = vrot.slane %v886, 4
    %v888 = vadd.f32 %v886, %v887
    %v889 = vrot.slane %v888, 2
    %v890 = vadd.f32 %v888, %v889
    %v891 = vrot.slane %v890, 1
    %v892 = vadd.f32 %v890, %v891
    %v893 = vld [vmem:[#allocation13] sm:$0xff]
    %v894 = vld [vmem:[#allocation13 + $0x8] sm:$0xff]
    %v895 = vld [vmem:[#allocation13 + $0x10] sm:$0xff]
    %v896 = vld [vmem:[#allocation13 + $0x18] sm:$0xff]
    %v897 = vld [vmem:[#allocation13 + $0x20] sm:$0xff]
    %v898 = vld [vmem:[#allocation13 + $0x28] sm:$0xff]
    %v899 = vld [vmem:[#allocation13 + $0x30] sm:$0xff]
    %v900 = vld [vmem:[#allocation13 + $0x38] sm:$0xff]
    %v901 = vld [vmem:[#allocation13 + $0x40] sm:$0xff]
    %v902 = vld [vmem:[#allocation13 + $0x48] sm:$0xff]
    %v903 = vld [vmem:[#allocation13 + $0x50] sm:$0xff]
    %v904 = vld [vmem:[#allocation13 + $0x58] sm:$0xff]
    %v905 = vld [vmem:[#allocation13 + $0x60] sm:$0xff]
    %v906 = vld [vmem:[#allocation13 + $0x68] sm:$0xff]
    %v907 = vld [vmem:[#allocation13 + $0x70] sm:$0xff]
    %v908 = vld [vmem:[#allocation13 + $0x78] sm:$0xff]
    %v909 = vld [vmem:[#allocation13 + $0x80] sm:$0xff]
    %v910 = vld [vmem:[#allocation13 + $0x88] sm:$0xff]
    %v911 = vld [vmem:[#allocation13 + $0x90] sm:$0xff]
    %v912 = vld [vmem:[#allocation13 + $0x98] sm:$0xff]
    %v913 = vld [vmem:[#allocation13 + $0xa0] sm:$0xff]
    %v914 = vld [vmem:[#allocation13 + $0xa8] sm:$0xff]
    %v915 = vld [vmem:[#allocation13 + $0xb0] sm:$0xff]
    %v916 = vld [vmem:[#allocation13 + $0xb8] sm:$0xff]
    %v917 = vld [vmem:[#allocation13 + $0xc0] sm:$0xff]
    %v918 = vld [vmem:[#allocation13 + $0xc8] sm:$0xff]
    %v919 = vld [vmem:[#allocation13 + $0xd0] sm:$0xff]
    %v920 = vld [vmem:[#allocation13 + $0xd8] sm:$0xff]
    %v921 = vld [vmem:[#allocation13 + $0xe0] sm:$0xff]
    %v922 = vld [vmem:[#allocation13 + $0xe8] sm:$0xff]
    %v923 = vld [vmem:[#allocation13 + $0xf0] sm:$0xff]
    %v924 = vld [vmem:[#allocation13 + $0xf8] sm:$0xff]
    %v925 = vld [vmem:[#allocation13 + $0x100] sm:$0xff]
    %v926 = vld [vmem:[#allocation13 + $0x108] sm:$0xff]
    %v927 = vld [vmem:[#allocation13 + $0x110] sm:$0xff]
    %v928 = vld [vmem:[#allocation13 + $0x118] sm:$0xff]
    %v929 = vld [vmem:[#allocation13 + $0x120] sm:$0xff]
    %v930 = vld [vmem:[#allocation13 + $0x128] sm:$0xff]
    %v931 = vld [vmem:[#allocation13 + $0x130] sm:$0xff]
    %v932 = vld [vmem:[#allocation13 + $0x138] sm:$0xff]
    %v933 = vld [vmem:[#allocation13 + $0x140] sm:$0xff]
    %v934 = vld [vmem:[#allocation13 + $0x148] sm:$0xff]
    %v935 = vld [vmem:[#allocation13 + $0x150] sm:$0xff]
    %v936 = vld [vmem:[#allocation13 + $0x158] sm:$0xff]
    %v937 = vld [vmem:[#allocation13 + $0x160] sm:$0xff]
    %v938 = vld [vmem:[#allocation13 + $0x168] sm:$0xff]
    %v939 = vld [vmem:[#allocation13 + $0x170] sm:$0xff]
    %v940 = vld [vmem:[#allocation13 + $0x178] sm:$0xff]
    %v941 = vld [vmem:[#allocation13 + $0x180] sm:$0xff]
    %v942 = vld [vmem:[#allocation13 + $0x188] sm:$0xff]
    %v943 = vld [vmem:[#allocation13 + $0x190] sm:$0xff]
    %v944 = vld [vmem:[#allocation13 + $0x198] sm:$0xff]
    %v945 = vld [vmem:[#allocation13 + $0x1a0] sm:$0xff]
    %v946 = vld [vmem:[#allocation13 + $0x1a8] sm:$0xff]
    %v947 = vld [vmem:[#allocation13 + $0x1b0] sm:$0xff]
    %v948 = vld [vmem:[#allocation13 + $0x1b8] sm:$0xff]
    %v949 = vld [vmem:[#allocation13 + $0x1c0] sm:$0xff]
    %v950 = vld [vmem:[#allocation13 + $0x1c8] sm:$0xff]
    %v951 = vld [vmem:[#allocation13 + $0x1d0] sm:$0xff]
    %v952 = vld [vmem:[#allocation13 + $0x1d8] sm:$0xff]
    %v953 = vld [vmem:[#allocation13 + $0x1e0] sm:$0xff]
    %v954 = vld [vmem:[#allocation13 + $0x1e8] sm:$0xff]
    %v955 = vld [vmem:[#allocation13 + $0x1f0] sm:$0xff]
    %v956 = vld [vmem:[#allocation13 + $0x1f8] sm:$0xff]
    %957 = vmatprep.subr.mxu0 %v894
    %958 = vmatpush1.msra.mxu0 %v893
    %959 = vmatprep.subr.mxu0 %v896
    %960 = vmatpush1.msra.mxu0 %v895
    %961 = vmatprep.subr.mxu0 %v898
    %962 = vmatpush1.msra.mxu0 %v897
    %963 = vmatprep.subr.mxu0 %v900
    %964 = vmatpush1.msra.mxu0 %v899
    %965 = vmatprep.subr.mxu0 %v902
    %966 = vmatpush1.msra.mxu0 %v901
    %967 = vmatprep.subr.mxu0 %v904
    %968 = vmatpush1.msra.mxu0 %v903
    %969 = vmatprep.subr.mxu0 %v906
    %970 = vmatpush1.msra.mxu0 %v905
    %971 = vmatprep.subr.mxu0 %v908
    %972 = vmatpush1.msra.mxu0 %v907
    %973 = vmatprep.subr.mxu0 %v910
    %974 = vmatpush1.msra.mxu0 %v909
    %975 = vmatprep.subr.mxu0 %v912
    %976 = vmatpush1.msra.mxu0 %v911
    %977 = vmatprep.subr.mxu0 %v914
    %978 = vmatpush1.msra.mxu0 %v913
    %979 = vmatprep.subr.mxu0 %v916
    %980 = vmatpush1.msra.mxu0 %v915
    %981 = vmatprep.subr.mxu0 %v918
    %982 = vmatpush1.msra.mxu0 %v917
    %983 = vmatprep.subr.mxu0 %v920
    %984 = vmatpush1.msra.mxu0 %v919
    %985 = vmatprep.subr.mxu0 %v922
    %986 = vmatpush1.msra.mxu0 %v921
    %987 = vmatprep.subr.mxu0 %v924
    %988 = vmatpush1.msra.mxu0 %v923
    %989 = vmatprep.subr.mxu0 %v926
    %990 = vmatpush1.msra.mxu0 %v925
    %991 = vmatprep.subr.mxu0 %v928
    %992 = vmatpush1.msra.mxu0 %v927
    %993 = vmatprep.subr.mxu0 %v930
    %994 = vmatpush1.msra.mxu0 %v929
    %995 = vmatprep.subr.mxu0 %v932
    %996 = vmatpush1.msra.mxu0 %v931
    %997 = vmatprep.subr.mxu0 %v934
    %998 = vmatpush1.msra.mxu0 %v933
    %999 = vmatprep.subr.mxu0 %v936
    %1000 = vmatpush1.msra.mxu0 %v935
    %1001 = vmatprep.subr.mxu0 %v938
    %1002 = vmatpush1.msra.mxu0 %v937
    %1003 = vmatprep.subr.mxu0 %v940
    %1004 = vmatpush1.msra.mxu0 %v939
    %1005 = vmatprep.subr.mxu0 %v942
    %1006 = vmatpush1.msra.mxu0 %v941
    %1007 = vmatprep.subr.mxu0 %v944
    %1008 = vmatpush1.msra.mxu0 %v943
    %1009 = vmatprep.subr.mxu0 %v946
    %1010 = vmatpush1.msra.mxu0 %v945
    %1011 = vmatprep.subr.mxu0 %v948
    %1012 = vmatpush1.msra.mxu0 %v947
    %1013 = vmatprep.subr.mxu0 %v950
    %1014 = vmatpush1.msra.mxu0 %v949
    %1015 = vmatprep.subr.mxu0 %v952
    %1016 = vmatpush1.msra.mxu0 %v951
    %1017 = vmatprep.subr.mxu0 %v954
    %1018 = vmatpush1.msra.mxu0 %v953
    %1019 = vmatprep.subr.mxu0 %v956
    %1020 = vmatpush1.msra.mxu0 %v955
    %1021 = vmatprep.mubr.f32.mxu0 %v892
    %1022 = vmatmul.mubr.f32.gmra.mrb[0].mxu0 %v883
    %v1023 = vpop.f32.mrb[0].mxu0
    %v1024 = vadd.f32 0.0, %v1023
    %v1025 = vpop.f32.mrb[0].mxu0
    %v1026 = vadd.f32 0.0, %v1025
    %1027 = vdwg.mxu0
    %v1028 = vlaneseq
    %v1029 = vshrl.u32 %v1028, 7
    %v1030 = vsub.s32 0, %v1029
    %v1031 = vrot.slane %v1024, %v1030
    %v1032 = vlaneseq
    %v1033 = vshrl.u32 %v1032, 7
    %v1034 = vsub.s32 0, %v1033
    %v1035 = vrot.slane %v1026, %v1034
    %v1036 = vsub.f32 %v845, %v1031
    %v1037 = vsub.f32 %v846, %v1035
    %v1038 = vsub.f32 %v847, %v1031
    %v1039 = vsub.f32 %v848, %v1035
    %v1040 = vsub.f32 %v849, %v1031
    %v1041 = vsub.f32 %v850, %v1035
    %v1042 = vsub.f32 %v851, %v1031
    %v1043 = vsub.f32 %v852, %v1035
    %v1044 = vmul.f32 %v1036, %v1036
    %v1045 = vmul.f32 %v1037, %v1037
    %v1046 = vmul.f32 %v1038, %v1038
    %v1047 = vmul.f32 %v1039, %v1039
    %v1048 = vmul.f32 %v1040, %v1040
    %v1049 = vmul.f32 %v1041, %v1041
    %v1050 = vmul.f32 %v1042, %v1042
    %v1051 = vmul.f32 %v1043, %v1043
    %v1052 = vadd.f32 %v1044, %v1046
    %v1053 = vadd.f32 %v1052, %v1048
    %v1054 = vadd.f32 %v1053, %v1050
    %v1055 = vrot.slane %v1054, 4
    %v1056 = vadd.f32 %v1054, %v1055
    %v1057 = vrot.slane %v1056, 2
    %v1058 = vadd.f32 %v1056, %v1057
    %v1059 = vrot.slane %v1058, 1
    %v1060 = vadd.f32 %v1058, %v1059
    %v1061 = vadd.f32 %v1045, %v1047
    %v1062 = vadd.f32 %v1061, %v1049
    %v1063 = vadd.f32 %v1062, %v1051
    %v1064 = vrot.slane %v1063, 4
    %v1065 = vadd.f32 %v1063, %v1064
    %v1066 = vrot.slane %v1065, 2
    %v1067 = vadd.f32 %v1065, %v1066
    %v1068 = vrot.slane %v1067, 1
    %v1069 = vadd.f32 %v1067, %v1068
    %1070 = vmatprep.subr.mxu0 %v894
    %1071 = vmatpush1.msra.mxu0 %v893
    %1072 = vmatprep.subr.mxu0 %v896
    %1073 = vmatpush1.msra.mxu0 %v895
    %1074 = vmatprep.subr.mxu0 %v898
    %1075 = vmatpush1.msra.mxu0 %v897
    %1076 = vmatprep.subr.mxu0 %v900
    %1077 = vmatpush1.msra.mxu0 %v899
    %1078 = vmatprep.subr.mxu0 %v902
    %1079 = vmatpush1.msra.mxu0 %v901
    %1080 = vmatprep.subr.mxu0 %v904
    %1081 = vmatpush1.msra.mxu0 %v903
    %1082 = vmatprep.subr.mxu0 %v906
    %1083 = vmatpush1.msra.mxu0 %v905
    %1084 = vmatprep.subr.mxu0 %v908
    %1085 = vmatpush1.msra.mxu0 %v907
    %1086 = vmatprep.subr.mxu0 %v910
    %1087 = vmatpush1.msra.mxu0 %v909
    %1088 = vmatprep.subr.mxu0 %v912
    %1089 = vmatpush1.msra.mxu0 %v911
    %1090 = vmatprep.subr.mxu0 %v914
    %1091 = vmatpush1.msra.mxu0 %v913
    %1092 = vmatprep.subr.mxu0 %v916
    %1093 = vmatpush1.msra.mxu0 %v915
    %1094 = vmatprep.subr.mxu0 %v918
    %1095 = vmatpush1.msra.mxu0 %v917
    %1096 = vmatprep.subr.mxu0 %v920
    %1097 = vmatpush1.msra.mxu0 %v919
    %1098 = vmatprep.subr.mxu0 %v922
    %1099 = vmatpush1.msra.mxu0 %v921
    %1100 = vmatprep.subr.mxu0 %v924
    %1101 = vmatpush1.msra.mxu0 %v923
    %1102 = vmatprep.subr.mxu0 %v926
    %1103 = vmatpush1.msra.mxu0 %v925
    %1104 = vmatprep.subr.mxu0 %v928
    %1105 = vmatpush1.msra.mxu0 %v927
    %1106 = vmatprep.subr.mxu0 %v930
    %1107 = vmatpush1.msra.mxu0 %v929
    %1108 = vmatprep.subr.mxu0 %v932
    %1109 = vmatpush1.msra.mxu0 %v931
    %1110 = vmatprep.subr.mxu0 %v934
    %1111 = vmatpush1.msra.mxu0 %v933
    %1112 = vmatprep.subr.mxu0 %v936
    %1113 = vmatpush1.msra.mxu0 %v935
    %1114 = vmatprep.subr.mxu0 %v938
    %1115 = vmatpush1.msra.mxu0 %v937
    %1116 = vmatprep.subr.mxu0 %v940
    %1117 = vmatpush1.msra.mxu0 %v939
    %1118 = vmatprep.subr.mxu0 %v942
    %1119 = vmatpush1.msra.mxu0 %v941
    %1120 = vmatprep.subr.mxu0 %v944
    %1121 = vmatpush1.msra.mxu0 %v943
    %1122 = vmatprep.subr.mxu0 %v946
    %1123 = vmatpush1.msra.mxu0 %v945
    %1124 = vmatprep.subr.mxu0 %v948
    %1125 = vmatpush1.msra.mxu0 %v947
    %1126 = vmatprep.subr.mxu0 %v950
    %1127 = vmatpush1.msra.mxu0 %v949
    %1128 = vmatprep.subr.mxu0 %v952
    %1129 = vmatpush1.msra.mxu0 %v951
    %1130 = vmatprep.subr.mxu0 %v954
    %1131 = vmatpush1.msra.mxu0 %v953
    %1132 = vmatprep.subr.mxu0 %v956
    %1133 = vmatpush1.msra.mxu0 %v955
    %1134 = vmatprep.mubr.f32.mxu0 %v1069
    %1135 = vmatmul.mubr.f32.gmra.mrb[0].mxu0 %v1060
    %v1136 = vpop.f32.mrb[0].mxu0
    %v1137 = vadd.f32 1e-05, %v1136
    %v1138 = vpop.f32.mrb[0].mxu0
    %v1139 = vadd.f32 1e-05, %v1138
    %1140 = vdwg.mxu0
    %v1141 = vrsqrt.pop %v1137
    %v1142 = vrsqrt.pop %v1139
    %v1145 = vcombine.low %v1141, %v1142
    %v1147 = vunpack.c.l.s4 1966171168
    %v1148 = vunpack.c.0.s8 %v1147
    %v1149 = vlaneseq
    %v1150 = vshrl.u32 %v1149, 7
    %v1151 = vsub.s32 %v1148, %v1150
    %v1152 = vrot.slane %v1145, %v1151
    %v1154 = vunpack.c.l.s4 1966171168
    %v1155 = vunpack.c.0.s8 %v1154
    %v1156 = vlaneseq
    %v1157 = vshrl.u32 %v1156, 7
    %v1158 = vsub.s32 %v1155, %v1157
    %v1159 = vrot.slane %v1152, %v1158
    %v1161 = vmul.f32 %v873, %v1159
    %v1163 = vlaneseq
    %v1164 = vshrl.u32 %v1163, 7
    %v1165 = vsub.s32 0, %v1164
    %v1166 = vrot.slane %v1161, %v1165
    %v1167 = vlaneseq
    %v1168 = vshrl.u32 %v1167, 7
    %v1169 = vsub.s32 1, %v1168
    %v1170 = vrot.slane %v1161, %v1169
    %v1173 = vmul.f32 %v1036, %v1166
    %v1174 = vmul.f32 %v1037, %v1170
    %v1175 = vmul.f32 %v1038, %v1166
    %v1176 = vmul.f32 %v1039, %v1170
    %v1177 = vmul.f32 %v1040, %v1166
    %v1178 = vmul.f32 %v1041, %v1170
    %v1179 = vmul.f32 %v1042, %v1166
    %v1180 = vmul.f32 %v1043, %v1170
    %v1182 = vlaneseq
    %v1183 = vshrl.u32 %v1182, 7
    %v1184 = vsub.s32 0, %v1183
    %v1185 = vrot.slane %v874, %v1184
    %v1186 = vlaneseq
    %v1187 = vshrl.u32 %v1186, 7
    %v1188 = vsub.s32 1, %v1187
    %v1189 = vrot.slane %v874, %v1188
    %v1192 = vadd.f32 %v1173, %v1185
    %v1193 = vadd.f32 %v1174, %v1189
    %v1194 = vadd.f32 %v1175, %v1185
    %v1195 = vadd.f32 %v1176, %v1189
    %v1196 = vadd.f32 %v1177, %v1185
    %v1197 = vadd.f32 %v1178, %v1189
    %v1198 = vadd.f32 %v1179, %v1185
    %v1199 = vadd.f32 %v1180, %v1189
    %v1200 = vmax.f32 %v1192, 0.0
    %v1201 = vmax.f32 %v1193, 0.0
    %v1202 = vmax.f32 %v1194, 0.0
    %v1203 = vmax.f32 %v1195, 0.0
    %v1204 = vmax.f32 %v1196, 0.0
    %v1205 = vmax.f32 %v1197, 0.0
    %v1206 = vmax.f32 %v1198, 0.0
    %v1207 = vmax.f32 %v1199, 0.0
    %v1208 = vpack.c.bf16 %v1202, %v1200
    %v1209 = vpack.c.bf16 %v1203, %v1201
    %v1210 = vpack.c.bf16 %v1206, %v1204
    %v1211 = vpack.c.bf16 %v1207, %v1205
    %v1213 = vshrl.u32 %v1208, 16
    %v1215 = vrot.slane %v1213, 7
    %v1216 = vshll.u32 %v1208, 16
    %v1218 = vor.u32 %v1215, %v1216
    %v1220 = vshrl.u32 %v1209, 16
    %v1222 = vrot.slane %v1220, 7
    %v1223 = vshll.u32 %v1209, 16
    %v1225 = vor.u32 %v1222, %v1223
    %v1227 = vshrl.u32 %v1210, 16
    %v1229 = vrot.slane %v1227, 7
    %v1230 = vshll.u32 %v1210, 16
    %v1232 = vor.u32 %v1229, %v1230
    %v1234 = vshrl.u32 %v1211, 16
    %v1236 = vrot.slane %v1234, 7
    %v1237 = vshll.u32 %v1211, 16
    %v1239 = vor.u32 %v1236, %v1237
    %vm1248 = vcmask 1040384
    %vm1249 = vsmask.f32 256
    %vm1250 = vmand %vm1248, %vm1249
    %v1251 = vsel %vm1250, 0, %v1218
    %v1252 = vsel %vm1250, 0, %v1225
    %v1253 = vsel %vm1250, 0, %v1232
    %v1254 = vsel %vm1250, 0, %v1239
    %v1255 = vsel %vm1250, %v1215, 0
    %v1256 = vsel %vm1250, %v1222, 0
    %v1257 = vsel %vm1250, %v1229, 0
    %v1258 = vsel %vm1250, %v1236, 0
    %v1259 = vld [vmem:[#allocation8] sm:$0xff]
    %v1260 = vld [vmem:[#allocation8 + $0x8] sm:$0xff]
    %v1261 = vld [vmem:[#allocation8 + $0x10] sm:$0xff]
    %v1262 = vld [vmem:[#allocation8 + $0x18] sm:$0xff]
    %v1263 = vld [vmem:[#allocation8 + $0x20] sm:$0xff]
    %v1264 = vld [vmem:[#allocation8 + $0x28] sm:$0xff]
    %v1265 = vld [vmem:[#allocation8 + $0x30] sm:$0xff]
    %v1266 = vld [vmem:[#allocation8 + $0x38] sm:$0xff]
    %v1267 = vld [vmem:[#allocation8 + $0x40] sm:$0xff]
    %v1268 = vld [vmem:[#allocation8 + $0x48] sm:$0xff]
    %v1269 = vld [vmem:[#allocation8 + $0x50] sm:$0xff]
    %v1270 = vld [vmem:[#allocation8 + $0x58] sm:$0xff]
    %v1271 = vld [vmem:[#allocation8 + $0x60] sm:$0xff]
    %v1272 = vld [vmem:[#allocation8 + $0x68] sm:$0xff]
    %v1273 = vld [vmem:[#allocation8 + $0x70] sm:$0xff]
    %v1274 = vld [vmem:[#allocation8 + $0x78] sm:$0xff]
    %v1275 = vld [vmem:[#allocation8 + $0x80] sm:$0xff]
    %v1276 = vld [vmem:[#allocation8 + $0x88] sm:$0xff]
    %v1277 = vld [vmem:[#allocation8 + $0x90] sm:$0xff]
    %v1278 = vld [vmem:[#allocation8 + $0x98] sm:$0xff]
    %v1279 = vld [vmem:[#allocation8 + $0xa0] sm:$0xff]
    %v1280 = vld [vmem:[#allocation8 + $0xa8] sm:$0xff]
    %v1281 = vld [vmem:[#allocation8 + $0xb0] sm:$0xff]
    %v1282 = vld [vmem:[#allocation8 + $0xb8] sm:$0xff]
    %v1283 = vld [vmem:[#allocation8 + $0xc0] sm:$0xff]
    %v1284 = vld [vmem:[#allocation8 + $0xc8] sm:$0xff]
    %v1285 = vld [vmem:[#allocation8 + $0xd0] sm:$0xff]
    %v1286 = vld [vmem:[#allocation8 + $0xd8] sm:$0xff]
    %v1287 = vld [vmem:[#allocation8 + $0xe0] sm:$0xff]
    %v1288 = vld [vmem:[#allocation8 + $0xe8] sm:$0xff]
    %v1289 = vld [vmem:[#allocation8 + $0xf0] sm:$0xff]
    %v1290 = vld [vmem:[#allocation8 + $0xf8] sm:$0xff]
    %vm1291 = vsmask.f32 7424
    %v1293 = vshrl.u32 %v1251, 16
    %v1295 = vshll.u32 %v1251, 16
    %v1297 = vrot.slane %v1295, 1
    %v1298 = vor.u32 %v1293, %v1297
    %v1300 = vshll.u32 %v1255, 16
    %v1302 = vrot.slane %v1300, 1
    %v1303 = vsel %vm1291, %v1298, %v1302
    %v1305 = vshrl.u32 %v1252, 16
    %v1307 = vshll.u32 %v1252, 16
    %v1309 = vrot.slane %v1307, 1
    %v1310 = vor.u32 %v1305, %v1309
    %v1312 = vshll.u32 %v1256, 16
    %v1314 = vrot.slane %v1312, 1
    %v1315 = vsel %vm1291, %v1310, %v1314
    %v1317 = vshrl.u32 %v1253, 16
    %v1319 = vshll.u32 %v1253, 16
    %v1321 = vrot.slane %v1319, 1
    %v1322 = vor.u32 %v1317, %v1321
    %v1324 = vshll.u32 %v1257, 16
    %v1326 = vrot.slane %v1324, 1
    %v1327 = vsel %vm1291, %v1322, %v1326
    %v1329 = vshrl.u32 %v1254, 16
    %v1331 = vshll.u32 %v1254, 16
    %v1333 = vrot.slane %v1331, 1
    %v1334 = vor.u32 %v1329, %v1333
    %v1336 = vshll.u32 %v1258, 16
    %v1338 = vrot.slane %v1336, 1
    %v1339 = vsel %vm1291, %v1334, %v1338
    %v1344 = vld [vmem:[#allocation10] sm:$0xff]
    %v1345 = vld [vmem:[#allocation10 + $0x8] sm:$0xff]
    %v1346 = vld [vmem:[#allocation10 + $0x10] sm:$0xff]
    %v1347 = vld [vmem:[#allocation10 + $0x18] sm:$0xff]
    %v1348 = vld [vmem:[#allocation10 + $0x20] sm:$0xff]
    %v1349 = vld [vmem:[#allocation10 + $0x28] sm:$0xff]
    %v1350 = vld [vmem:[#allocation10 + $0x30] sm:$0xff]
    %v1351 = vld [vmem:[#allocation10 + $0x38] sm:$0xff]
    %v1352 = vld [vmem:[#allocation10 + $0x40] sm:$0xff]
    %v1353 = vld [vmem:[#allocation10 + $0x48] sm:$0xff]
    %v1354 = vld [vmem:[#allocation10 + $0x50] sm:$0xff]
    %v1355 = vld [vmem:[#allocation10 + $0x58] sm:$0xff]
    %v1356 = vld [vmem:[#allocation10 + $0x60] sm:$0xff]
    %v1357 = vld [vmem:[#allocation10 + $0x68] sm:$0xff]
    %v1358 = vld [vmem:[#allocation10 + $0x70] sm:$0xff]
    %v1359 = vld [vmem:[#allocation10 + $0x78] sm:$0xff]
    %v1360 = vld [vmem:[#allocation10 + $0x80] sm:$0xff]
    %v1361 = vld [vmem:[#allocation10 + $0x88] sm:$0xff]
    %v1362 = vld [vmem:[#allocation10 + $0x90] sm:$0xff]
    %v1363 = vld [vmem:[#allocation10 + $0x98] sm:$0xff]
    %v1364 = vld [vmem:[#allocation10 + $0xa0] sm:$0xff]
    %v1365 = vld [vmem:[#allocation10 + $0xa8] sm:$0xff]
    %v1366 = vld [vmem:[#allocation10 + $0xb0] sm:$0xff]
    %v1367 = vld [vmem:[#allocation10 + $0xb8] sm:$0xff]
    %v1368 = vld [vmem:[#allocation10 + $0xc0] sm:$0xff]
    %v1369 = vld [vmem:[#allocation10 + $0xc8] sm:$0xff]
    %v1370 = vld [vmem:[#allocation10 + $0xd0] sm:$0xff]
    %v1371 = vld [vmem:[#allocation10 + $0xd8] sm:$0xff]
    %v1372 = vld [vmem:[#allocation10 + $0xe0] sm:$0xff]
    %v1373 = vld [vmem:[#allocation10 + $0xe8] sm:$0xff]
    %v1374 = vld [vmem:[#allocation10 + $0xf0] sm:$0xff]
    %v1375 = vld [vmem:[#allocation10 + $0xf8] sm:$0xff]
    %v1408 = vunpack.c.l.b16 %v1344
    %v1409 = vunpack.c.h.b16 %v1344
    %v1410 = vunpack.c.l.b16 %v1345
    %v1411 = vunpack.c.h.b16 %v1345
    %v1412 = vunpack.c.l.b16 %v1346
    %v1413 = vunpack.c.h.b16 %v1346
    %v1414 = vunpack.c.l.b16 %v1347
    %v1415 = vunpack.c.h.b16 %v1347
    %v1416 = vunpack.c.l.b16 %v1348
    %v1417 = vunpack.c.h.b16 %v1348
    %v1418 = vunpack.c.l.b16 %v1349
    %v1419 = vunpack.c.h.b16 %v1349
    %v1420 = vunpack.c.l.b16 %v1350
    %v1421 = vunpack.c.h.b16 %v1350
    %v1422 = vunpack.c.l.b16 %v1351
    %v1423 = vunpack.c.h.b16 %v1351
    %v1424 = vunpack.c.l.b16 %v1352
    %v1425 = vunpack.c.h.b16 %v1352
    %v1426 = vunpack.c.l.b16 %v1353
    %v1427 = vunpack.c.h.b16 %v1353
    %v1428 = vunpack.c.l.b16 %v1354
    %v1429 = vunpack.c.h.b16 %v1354
    %v1430 = vunpack.c.l.b16 %v1355
    %v1431 = vunpack.c.h.b16 %v1355
    %v1432 = vunpack.c.l.b16 %v1356
    %v1433 = vunpack.c.h.b16 %v1356
    %v1434 = vunpack.c.l.b16 %v1357
    %v1435 = vunpack.c.h.b16 %v1357
    %v1436 = vunpack.c.l.b16 %v1358
    %v1437 = vunpack.c.h.b16 %v1358
    %v1438 = vunpack.c.l.b16 %v1359
    %v1439 = vunpack.c.h.b16 %v1359
    %v1440 = vunpack.c.l.b16 %v1360
    %v1441 = vunpack.c.h.b16 %v1360
    %v1442 = vunpack.c.l.b16 %v1361
    %v1443 = vunpack.c.h.b16 %v1361
    %v1444 = vunpack.c.l.b16 %v1362
    %v1445 = vunpack.c.h.b16 %v1362
    %v1446 = vunpack.c.l.b16 %v1363
    %v1447 = vunpack.c.h.b16 %v1363
    %v1448 = vunpack.c.l.b16 %v1364
    %v1449 = vunpack.c.h.b16 %v1364
    %v1450 = vunpack.c.l.b16 %v1365
    %v1451 = vunpack.c.h.b16 %v1365
    %v1452 = vunpack.c.l.b16 %v1366
    %v1453 = vunpack.c.h.b16 %v1366
    %v1454 = vunpack.c.l.b16 %v1367
    %v1455 = vunpack.c.h.b16 %v1367
    %v1456 = vunpack.c.l.b16 %v1368
    %v1457 = vunpack.c.h.b16 %v1368
    %v1458 = vunpack.c.l.b16 %v1369
    %v1459 = vunpack.c.h.b16 %v1369
    %v1460 = vunpack.c.l.b16 %v1370
    %v1461 = vunpack.c.h.b16 %v1370
    %v1462 = vunpack.c.l.b16 %v1371
    %v1463 = vunpack.c.h.b16 %v1371
    %v1464 = vunpack.c.l.b16 %v1372
    %v1465 = vunpack.c.h.b16 %v1372
    %v1466 = vunpack.c.l.b16 %v1373
    %v1467 = vunpack.c.h.b16 %v1373
    %v1468 = vunpack.c.l.b16 %v1374
    %v1469 = vunpack.c.h.b16 %v1374
    %v1470 = vunpack.c.l.b16 %v1375
    %v1471 = vunpack.c.h.b16 %v1375
    %v1472 = vpack.c.b16 %v1410, %v1408
    %v1473 = vpack.c.b16 %v1411, %v1409
    %v1474 = vpack.c.b16 %v1414, %v1412
    %v1475 = vpack.c.b16 %v1415, %v1413
    %v1476 = vpack.c.b16 %v1418, %v1416
    %v1477 = vpack.c.b16 %v1419, %v1417
    %v1478 = vpack.c.b16 %v1422, %v1420
    %v1479 = vpack.c.b16 %v1423, %v1421
    %v1480 = vpack.c.b16 %v1426, %v1424
    %v1481 = vpack.c.b16 %v1427, %v1425
    %v1482 = vpack.c.b16 %v1430, %v1428
    %v1483 = vpack.c.b16 %v1431, %v1429
    %v1484 = vpack.c.b16 %v1434, %v1432
    %v1485 = vpack.c.b16 %v1435, %v1433
    %v1486 = vpack.c.b16 %v1438, %v1436
    %v1487 = vpack.c.b16 %v1439, %v1437
    %v1488 = vpack.c.b16 %v1442, %v1440
    %v1489 = vpack.c.b16 %v1443, %v1441
    %v1490 = vpack.c.b16 %v1446, %v1444
    %v1491 = vpack.c.b16 %v1447, %v1445
    %v1492 = vpack.c.b16 %v1450, %v1448
    %v1493 = vpack.c.b16 %v1451, %v1449
    %v1494 = vpack.c.b16 %v1454, %v1452
    %v1495 = vpack.c.b16 %v1455, %v1453
    %v1496 = vpack.c.b16 %v1458, %v1456
    %v1497 = vpack.c.b16 %v1459, %v1457
    %v1498 = vpack.c.b16 %v1462, %v1460
    %v1499 = vpack.c.b16 %v1463, %v1461
    %v1500 = vpack.c.b16 %v1466, %v1464
    %v1501 = vpack.c.b16 %v1467, %v1465
    %v1502 = vpack.c.b16 %v1470, %v1468
    %v1503 = vpack.c.b16 %v1471, %v1469
    %1536 = vmatprep.subr.bf16.mxu0 %v1473
    %1537 = vmatpush1.bf16.msra.mxu0 %v1472
    %1538 = vmatprep.subr.bf16.mxu0 %v1475
    %1539 = vmatpush1.bf16.msra.mxu0 %v1474
    %1540 = vmatprep.subr.bf16.mxu0 %v1477
    %1541 = vmatpush1.bf16.msra.mxu0 %v1476
    %1542 = vmatprep.subr.bf16.mxu0 %v1479
    %1543 = vmatpush1.bf16.msra.mxu0 %v1478
    %1544 = vmatprep.subr.bf16.mxu0 %v1481
    %1545 = vmatpush1.bf16.msra.mxu0 %v1480
    %1546 = vmatprep.subr.bf16.mxu0 %v1483
    %1547 = vmatpush1.bf16.msra.mxu0 %v1482
    %1548 = vmatprep.subr.bf16.mxu0 %v1485
    %1549 = vmatpush1.bf16.msra.mxu0 %v1484
    %1550 = vmatprep.subr.bf16.mxu0 %v1487
    %1551 = vmatpush1.bf16.msra.mxu0 %v1486
    %1552 = vmatprep.subr.bf16.mxu0 %v1489
    %1553 = vmatpush1.bf16.msra.mxu0 %v1488
    %1554 = vmatprep.subr.bf16.mxu0 %v1491
    %1555 = vmatpush1.bf16.msra.mxu0 %v1490
    %1556 = vmatprep.subr.bf16.mxu0 %v1493
    %1557 = vmatpush1.bf16.msra.mxu0 %v1492
    %1558 = vmatprep.subr.bf16.mxu0 %v1495
    %1559 = vmatpush1.bf16.msra.mxu0 %v1494
    %1560 = vmatprep.subr.bf16.mxu0 %v1497
    %1561 = vmatpush1.bf16.msra.mxu0 %v1496
    %1562 = vmatprep.subr.bf16.mxu0 %v1499
    %1563 = vmatpush1.bf16.msra.mxu0 %v1498
    %1564 = vmatprep.subr.bf16.mxu0 %v1501
    %1565 = vmatpush1.bf16.msra.mxu0 %v1500
    %1566 = vmatprep.subr.bf16.mxu0 %v1503
    %1567 = vmatpush1.bf16.msra.mxu0 %v1502
    %1568 = vmatprep.mubr.bf16.mxu0 %v1315
    %1569 = vmatmul.mubr.bf16.gmra.mrb[0].mxu0 %v1303
    %v1570 = vpop.f32.mrb[0].mxu0
    %v1571 = vadd.f32 0.0, %v1570
    %v1572 = vpop.f32.mrb[0].mxu0
    %v1573 = vadd.f32 0.0, %v1572
    %v1574 = vpop.f32.mrb[0].mxu0
    %v1575 = vadd.f32 0.0, %v1574
    %v1576 = vpop.f32.mrb[0].mxu0
    %v1577 = vadd.f32 0.0, %v1576
    %1578 = vmatprep.mubr.bf16.mxu0 %v1339
    %1579 = vmatmul.mubr.bf16.gmra.mrb[0].mxu0 %v1327
    %v1580 = vpop.f32.mrb[0].mxu0
    %v1581 = vadd.f32 0.0, %v1580
    %v1582 = vpop.f32.mrb[0].mxu0
    %v1583 = vadd.f32 0.0, %v1582
    %v1584 = vpop.f32.mrb[0].mxu0
    %v1585 = vadd.f32 0.0, %v1584
    %v1586 = vpop.f32.mrb[0].mxu0
    %v1587 = vadd.f32 0.0, %v1586
    %1588 = vdwg.mxu0
    %v1621 = vunpack.c.l.b16 %v1259
    %v1622 = vunpack.c.h.b16 %v1259
    %v1623 = vunpack.c.l.b16 %v1260
    %v1624 = vunpack.c.h.b16 %v1260
    %v1625 = vunpack.c.l.b16 %v1261
    %v1626 = vunpack.c.h.b16 %v1261
    %v1627 = vunpack.c.l.b16 %v1262
    %v1628 = vunpack.c.h.b16 %v1262
    %v1629 = vunpack.c.l.b16 %v1263
    %v1630 = vunpack.c.h.b16 %v1263
    %v1631 = vunpack.c.l.b16 %v1264
    %v1632 = vunpack.c.h.b16 %v1264
    %v1633 = vunpack.c.l.b16 %v1265
    %v1634 = vunpack.c.h.b16 %v1265
    %v1635 = vunpack.c.l.b16 %v1266
    %v1636 = vunpack.c.h.b16 %v1266
    %v1637 = vunpack.c.l.b16 %v1267
    %v1638 = vunpack.c.h.b16 %v1267
    %v1639 = vunpack.c.l.b16 %v1268
    %v1640 = vunpack.c.h.b16 %v1268
    %v1641 = vunpack.c.l.b16 %v1269
    %v1642 = vunpack.c.h.b16 %v1269
    %v1643 = vunpack.c.l.b16 %v1270
    %v1644 = vunpack.c.h.b16 %v1270
    %v1645 = vunpack.c.l.b16 %v1271
    %v1646 = vunpack.c.h.b16 %v1271
    %v1647 = vunpack.c.l.b16 %v1272
    %v1648 = vunpack.c.h.b16 %v1272
    %v1649 = vunpack.c.l.b16 %v1273
    %v1650 = vunpack.c.h.b16 %v1273
    %v1651 = vunpack.c.l.b16 %v1274
    %v1652 = vunpack.c.h.b16 %v1274
    %v1653 = vunpack.c.l.b16 %v1275
    %v1654 = vunpack.c.h.b16 %v1275
    %v1655 = vunpack.c.l.b16 %v1276
    %v1656 = vunpack.c.h.b16 %v1276
    %v1657 = vunpack.c.l.b16 %v1277
    %v1658 = vunpack.c.h.b16 %v1277
    %v1659 = vunpack.c.l.b16 %v1278
    %v1660 = vunpack.c.h.b16 %v1278
    %v1661 = vunpack.c.l.b16 %v1279
    %v1662 = vunpack.c.h.b16 %v1279
    %v1663 = vunpack.c.l.b16 %v1280
    %v1664 = vunpack.c.h.b16 %v1280
    %v1665 = vunpack.c.l.b16 %v1281
    %v1666 = vunpack.c.h.b16 %v1281
    %v1667 = vunpack.c.l.b16 %v1282
    %v1668 = vunpack.c.h.b16 %v1282
    %v1669 = vunpack.c.l.b16 %v1283
    %v1670 = vunpack.c.h.b16 %v1283
    %v1671 = vunpack.c.l.b16 %v1284
    %v1672 = vunpack.c.h.b16 %v1284
    %v1673 = vunpack.c.l.b16 %v1285
    %v1674 = vunpack.c.h.b16 %v1285
    %v1675 = vunpack.c.l.b16 %v1286
    %v1676 = vunpack.c.h.b16 %v1286
    %v1677 = vunpack.c.l.b16 %v1287
    %v1678 = vunpack.c.h.b16 %v1287
    %v1679 = vunpack.c.l.b16 %v1288
    %v1680 = vunpack.c.h.b16 %v1288
    %v1681 = vunpack.c.l.b16 %v1289
    %v1682 = vunpack.c.h.b16 %v1289
    %v1683 = vunpack.c.l.b16 %v1290
    %v1684 = vunpack.c.h.b16 %v1290
    %v1685 = vpack.c.b16 %v1623, %v1621
    %v1686 = vpack.c.b16 %v1624, %v1622
    %v1687 = vpack.c.b16 %v1627, %v1625
    %v1688 = vpack.c.b16 %v1628, %v1626
    %v1689 = vpack.c.b16 %v1631, %v1629
    %v1690 = vpack.c.b16 %v1632, %v1630
    %v1691 = vpack.c.b16 %v1635, %v1633
    %v1692 = vpack.c.b16 %v1636, %v1634
    %v1693 = vpack.c.b16 %v1639, %v1637
    %v1694 = vpack.c.b16 %v1640, %v1638
    %v1695 = vpack.c.b16 %v1643, %v1641
    %v1696 = vpack.c.b16 %v1644, %v1642
    %v1697 = vpack.c.b16 %v1647, %v1645
    %v1698 = vpack.c.b16 %v1648, %v1646
    %v1699 = vpack.c.b16 %v1651, %v1649
    %v1700 = vpack.c.b16 %v1652, %v1650
    %v1701 = vpack.c.b16 %v1655, %v1653
    %v1702 = vpack.c.b16 %v1656, %v1654
    %v1703 = vpack.c.b16 %v1659, %v1657
    %v1704 = vpack.c.b16 %v1660, %v1658
    %v1705 = vpack.c.b16 %v1663, %v1661
    %v1706 = vpack.c.b16 %v1664, %v1662
    %v1707 = vpack.c.b16 %v1667, %v1665
    %v1708 = vpack.c.b16 %v1668, %v1666
    %v1709 = vpack.c.b16 %v1671, %v1669
    %v1710 = vpack.c.b16 %v1672, %v1670
    %v1711 = vpack.c.b16 %v1675, %v1673
    %v1712 = vpack.c.b16 %v1676, %v1674
    %v1713 = vpack.c.b16 %v1679, %v1677
    %v1714 = vpack.c.b16 %v1680, %v1678
    %v1715 = vpack.c.b16 %v1683, %v1681
    %v1716 = vpack.c.b16 %v1684, %v1682
    %1749 = vmatprep.subr.bf16.mxu0 %v1686
    %1750 = vmatpush1.bf16.msra.mxu0 %v1685
    %1751 = vmatprep.subr.bf16.mxu0 %v1688
    %1752 = vmatpush1.bf16.msra.mxu0 %v1687
    %1753 = vmatprep.subr.bf16.mxu0 %v1690
    %1754 = vmatpush1.bf16.msra.mxu0 %v1689
    %1755 = vmatprep.subr.bf16.mxu0 %v1692
    %1756 = vmatpush1.bf16.msra.mxu0 %v1691
    %1757 = vmatprep.subr.bf16.mxu0 %v1694
    %1758 = vmatpush1.bf16.msra.mxu0 %v1693
    %1759 = vmatprep.subr.bf16.mxu0 %v1696
    %1760 = vmatpush1.bf16.msra.mxu0 %v1695
    %1761 = vmatprep.subr.bf16.mxu0 %v1698
    %1762 = vmatpush1.bf16.msra.mxu0 %v1697
    %1763 = vmatprep.subr.bf16.mxu0 %v1700
    %1764 = vmatpush1.bf16.msra.mxu0 %v1699
    %1765 = vmatprep.subr.bf16.mxu0 %v1702
    %1766 = vmatpush1.bf16.msra.mxu0 %v1701
    %1767 = vmatprep.subr.bf16.mxu0 %v1704
    %1768 = vmatpush1.bf16.msra.mxu0 %v1703
    %1769 = vmatprep.subr.bf16.mxu0 %v1706
    %1770 = vmatpush1.bf16.msra.mxu0 %v1705
    %1771 = vmatprep.subr.bf16.mxu0 %v1708
    %1772 = vmatpush1.bf16.msra.mxu0 %v1707
    %1773 = vmatprep.subr.bf16.mxu0 %v1710
    %1774 = vmatpush1.bf16.msra.mxu0 %v1709
    %1775 = vmatprep.subr.bf16.mxu0 %v1712
    %1776 = vmatpush1.bf16.msra.mxu0 %v1711
    %1777 = vmatprep.subr.bf16.mxu0 %v1714
    %1778 = vmatpush1.bf16.msra.mxu0 %v1713
    %1779 = vmatprep.subr.bf16.mxu0 %v1716
    %1780 = vmatpush1.bf16.msra.mxu0 %v1715
    %1781 = vmatprep.mubr.bf16.mxu0 %v1252
    %1782 = vmatmul.mubr.bf16.gmra.mrb[0].mxu0 %v1251
    %v1783 = vpop.f32.mrb[0].mxu0
    %v1784 = vadd.f32 %v1571, %v1783
    %v1785 = vpop.f32.mrb[0].mxu0
    %v1786 = vadd.f32 %v1573, %v1785
    %v1787 = vpop.f32.mrb[0].mxu0
    %v1788 = vadd.f32 %v1575, %v1787
    %v1789 = vpop.f32.mrb[0].mxu0
    %v1790 = vadd.f32 %v1577, %v1789
    %1791 = vmatprep.mubr.bf16.mxu0 %v1254
    %1792 = vmatmul.mubr.bf16.gmra.mrb[0].mxu0 %v1253
    %v1793 = vpop.f32.mrb[0].mxu0
    %v1794 = vadd.f32 %v1581, %v1793
    %v1795 = vpop.f32.mrb[0].mxu0
    %v1796 = vadd.f32 %v1583, %v1795
    %v1797 = vpop.f32.mrb[0].mxu0
    %v1798 = vadd.f32 %v1585, %v1797
    %v1799 = vpop.f32.mrb[0].mxu0
    %v1800 = vadd.f32 %v1587, %v1799
    %1801 = vdwg.mxu0
    %vm1810 = vcmask 1046528
    %v1811 = vrot.slane %v1251, 1
    %v1812 = vrot.slane %v1255, 1
    %v1813 = vsel %vm1810, %v1811, %v1812
    %v1814 = vrot.slane %v1252, 1
    %v1815 = vrot.slane %v1256, 1
    %v1816 = vsel %vm1810, %v1814, %v1815
    %v1817 = vrot.slane %v1253, 1
    %v1818 = vrot.slane %v1257, 1
    %v1819 = vsel %vm1810, %v1817, %v1818
    %v1820 = vrot.slane %v1254, 1
    %v1821 = vrot.slane %v1258, 1
    %v1822 = vsel %vm1810, %v1820, %v1821
    %v1827 = vld [vmem:[#allocation11] sm:$0xff]
    %v1828 = vld [vmem:[#allocation11 + $0x8] sm:$0xff]
    %v1829 = vld [vmem:[#allocation11 + $0x10] sm:$0xff]
    %v1830 = vld [vmem:[#allocation11 + $0x18] sm:$0xff]
    %v1831 = vld [vmem:[#allocation11 + $0x20] sm:$0xff]
    %v1832 = vld [vmem:[#allocation11 + $0x28] sm:$0xff]
    %v1833 = vld [vmem:[#allocation11 + $0x30] sm:$0xff]
    %v1834 = vld [vmem:[#allocation11 + $0x38] sm:$0xff]
    %v1835 = vld [vmem:[#allocation11 + $0x40] sm:$0xff]
    %v1836 = vld [vmem:[#allocation11 + $0x48] sm:$0xff]
    %v1837 = vld [vmem:[#allocation11 + $0x50] sm:$0xff]
    %v1838 = vld [vmem:[#allocation11 + $0x58] sm:$0xff]
    %v1839 = vld [vmem:[#allocation11 + $0x60] sm:$0xff]
    %v1840 = vld [vmem:[#allocation11 + $0x68] sm:$0xff]
    %v1841 = vld [vmem:[#allocation11 + $0x70] sm:$0xff]
    %v1842 = vld [vmem:[#allocation11 + $0x78] sm:$0xff]
    %v1843 = vld [vmem:[#allocation11 + $0x80] sm:$0xff]
    %v1844 = vld [vmem:[#allocation11 + $0x88] sm:$0xff]
    %v1845 = vld [vmem:[#allocation11 + $0x90] sm:$0xff]
    %v1846 = vld [vmem:[#allocation11 + $0x98] sm:$0xff]
    %v1847 = vld [vmem:[#allocation11 + $0xa0] sm:$0xff]
    %v1848 = vld [vmem:[#allocation11 + $0xa8] sm:$0xff]
    %v1849 = vld [vmem:[#allocation11 + $0xb0] sm:$0xff]
    %v1850 = vld [vmem:[#allocation11 + $0xb8] sm:$0xff]
    %v1851 = vld [vmem:[#allocation11 + $0xc0] sm:$0xff]
    %v1852 = vld [vmem:[#allocation11 + $0xc8] sm:$0xff]
    %v1853 = vld [vmem:[#allocation11 + $0xd0] sm:$0xff]
    %v1854 = vld [vmem:[#allocation11 + $0xd8] sm:$0xff]
    %v1855 = vld [vmem:[#allocation11 + $0xe0] sm:$0xff]
    %v1856 = vld [vmem:[#allocation11 + $0xe8] sm:$0xff]
    %v1857 = vld [vmem:[#allocation11 + $0xf0] sm:$0xff]
    %v1858 = vld [vmem:[#allocation11 + $0xf8] sm:$0xff]
    %v1891 = vunpack.c.l.b16 %v1827
    %v1892 = vunpack.c.h.b16 %v1827
    %v1893 = vunpack.c.l.b16 %v1828
    %v1894 = vunpack.c.h.b16 %v1828
    %v1895 = vunpack.c.l.b16 %v1829
    %v1896 = vunpack.c.h.b16 %v1829
    %v1897 = vunpack.c.l.b16 %v1830
    %v1898 = vunpack.c.h.b16 %v1830
    %v1899 = vunpack.c.l.b16 %v1831
    %v1900 = vunpack.c.h.b16 %v1831
    %v1901 = vunpack.c.l.b16 %v1832
    %v1902 = vunpack.c.h.b16 %v1832
    %v1903 = vunpack.c.l.b16 %v1833
    %v1904 = vunpack.c.h.b16 %v1833
    %v1905 = vunpack.c.l.b16 %v1834
    %v1906 = vunpack.c.h.b16 %v1834
    %v1907 = vunpack.c.l.b16 %v1835
    %v1908 = vunpack.c.h.b16 %v1835
    %v1909 = vunpack.c.l.b16 %v1836
    %v1910 = vunpack.c.h.b16 %v1836
    %v1911 = vunpack.c.l.b16 %v1837
    %v1912 = vunpack.c.h.b16 %v1837
    %v1913 = vunpack.c.l.b16 %v1838
    %v1914 = vunpack.c.h.b16 %v1838
    %v1915 = vunpack.c.l.b16 %v1839
    %v1916 = vunpack.c.h.b16 %v1839
    %v1917 = vunpack.c.l.b16 %v1840
    %v1918 = vunpack.c.h.b16 %v1840
    %v1919 = vunpack.c.l.b16 %v1841
    %v1920 = vunpack.c.h.b16 %v1841
    %v1921 = vunpack.c.l.b16 %v1842
    %v1922 = vunpack.c.h.b16 %v1842
    %v1923 = vunpack.c.l.b16 %v1843
    %v1924 = vunpack.c.h.b16 %v1843
    %v1925 = vunpack.c.l.b16 %v1844
    %v1926 = vunpack.c.h.b16 %v1844
    %v1927 = vunpack.c.l.b16 %v1845
    %v1928 = vunpack.c.h.b16 %v1845
    %v1929 = vunpack.c.l.b16 %v1846
    %v1930 = vunpack.c.h.b16 %v1846
    %v1931 = vunpack.c.l.b16 %v1847
    %v1932 = vunpack.c.h.b16 %v1847
    %v1933 = vunpack.c.l.b16 %v1848
    %v1934 = vunpack.c.h.b16 %v1848
    %v1935 = vunpack.c.l.b16 %v1849
    %v1936 = vunpack.c.h.b16 %v1849
    %v1937 = vunpack.c.l.b16 %v1850
    %v1938 = vunpack.c.h.b16 %v1850
    %v1939 = vunpack.c.l.b16 %v1851
    %v1940 = vunpack.c.h.b16 %v1851
    %v1941 = vunpack.c.l.b16 %v1852
    %v1942 = vunpack.c.h.b16 %v1852
    %v1943 = vunpack.c.l.b16 %v1853
    %v1944 = vunpack.c.h.b16 %v1853
    %v1945 = vunpack.c.l.b16 %v1854
    %v1946 = vunpack.c.h.b16 %v1854
    %v1947 = vunpack.c.l.b16 %v1855
    %v1948 = vunpack.c.h.b16 %v1855
    %v1949 = vunpack.c.l.b16 %v1856
    %v1950 = vunpack.c.h.b16 %v1856
    %v1951 = vunpack.c.l.b16 %v1857
    %v1952 = vunpack.c.h.b16 %v1857
    %v1953 = vunpack.c.l.b16 %v1858
    %v1954 = vunpack.c.h.b16 %v1858
    %v1955 = vpack.c.b16 %v1893, %v1891
    %v1956 = vpack.c.b16 %v1894, %v1892
    %v1957 = vpack.c.b16 %v1897, %v1895
    %v1958 = vpack.c.b16 %v1898, %v1896
    %v1959 = vpack.c.b16 %v1901, %v1899
    %v1960 = vpack.c.b16 %v1902, %v1900
    %v1961 = vpack.c.b16 %v1905, %v1903
    %v1962 = vpack.c.b16 %v1906, %v1904
    %v1963 = vpack.c.b16 %v1909, %v1907
    %v1964 = vpack.c.b16 %v1910, %v1908
    %v1965 = vpack.c.b16 %v1913, %v1911
    %v1966 = vpack.c.b16 %v1914, %v1912
    %v1967 = vpack.c.b16 %v1917, %v1915
    %v1968 = vpack.c.b16 %v1918, %v1916
    %v1969 = vpack.c.b16 %v1921, %v1919
    %v1970 = vpack.c.b16 %v1922, %v1920
    %v1971 = vpack.c.b16 %v1925, %v1923
    %v1972 = vpack.c.b16 %v1926, %v1924
    %v1973 = vpack.c.b16 %v1929, %v1927
    %v1974 = vpack.c.b16 %v1930, %v1928
    %v1975 = vpack.c.b16 %v1933, %v1931
    %v1976 = vpack.c.b16 %v1934, %v1932
    %v1977 = vpack.c.b16 %v1937, %v1935
    %v1978 = vpack.c.b16 %v1938, %v1936
    %v1979 = vpack.c.b16 %v1941, %v1939
    %v1980 = vpack.c.b16 %v1942, %v1940
    %v1981 = vpack.c.b16 %v1945, %v1943
    %v1982 = vpack.c.b16 %v1946, %v1944
    %v1983 = vpack.c.b16 %v1949, %v1947
    %v1984 = vpack.c.b16 %v1950, %v1948
    %v1985 = vpack.c.b16 %v1953, %v1951
    %v1986 = vpack.c.b16 %v1954, %v1952
    %2019 = vmatprep.subr.bf16.mxu0 %v1956
    %2020 = vmatpush1.bf16.msra.mxu0 %v1955
    %2021 = vmatprep.subr.bf16.mxu0 %v1958
    %2022 = vmatpush1.bf16.msra.mxu0 %v1957
    %2023 = vmatprep.subr.bf16.mxu0 %v1960
    %2024 = vmatpush1.bf16.msra.mxu0 %v1959
    %2025 = vmatprep.subr.bf16.mxu0 %v1962
    %2026 = vmatpush1.bf16.msra.mxu0 %v1961
    %2027 = vmatprep.subr.bf16.mxu0 %v1964
    %2028 = vmatpush1.bf16.msra.mxu0 %v1963
    %2029 = vmatprep.subr.bf16.mxu0 %v1966
    %2030 = vmatpush1.bf16.msra.mxu0 %v1965
    %2031 = vmatprep.subr.bf16.mxu0 %v1968
    %2032 = vmatpush1.bf16.msra.mxu0 %v1967
    %2033 = vmatprep.subr.bf16.mxu0 %v1970
    %2034 = vmatpush1.bf16.msra.mxu0 %v1969
    %2035 = vmatprep.subr.bf16.mxu0 %v1972
    %2036 = vmatpush1.bf16.msra.mxu0 %v1971
    %2037 = vmatprep.subr.bf16.mxu0 %v1974
    %2038 = vmatpush1.bf16.msra.mxu0 %v1973
    %2039 = vmatprep.subr.bf16.mxu0 %v1976
    %2040 = vmatpush1.bf16.msra.mxu0 %v1975
    %2041 = vmatprep.subr.bf16.mxu0 %v1978
    %2042 = vmatpush1.bf16.msra.mxu0 %v1977
    %2043 = vmatprep.subr.bf16.mxu0 %v1980
    %2044 = vmatpush1.bf16.msra.mxu0 %v1979
    %2045 = vmatprep.subr.bf16.mxu0 %v1982
    %2046 = vmatpush1.bf16.msra.mxu0 %v1981
    %2047 = vmatprep.subr.bf16.mxu0 %v1984
    %2048 = vmatpush1.bf16.msra.mxu0 %v1983
    %2049 = vmatprep.subr.bf16.mxu0 %v1986
    %2050 = vmatpush1.bf16.msra.mxu0 %v1985
    %2051 = vmatprep.mubr.bf16.mxu0 %v1816
    %2052 = vmatmul.mubr.bf16.gmra.mrb[0].mxu0 %v1813
    %v2053 = vpop.f32.mrb[0].mxu0
    %v2054 = vadd.f32 0.0, %v2053
    %v2055 = vpop.f32.mrb[0].mxu0
    %v2056 = vadd.f32 0.0, %v2055
    %v2057 = vpop.f32.mrb[0].mxu0
    %v2058 = vadd.f32 0.0, %v2057
    %v2059 = vpop.f32.mrb[0].mxu0
    %v2060 = vadd.f32 0.0, %v2059
    %2061 = vmatprep.mubr.bf16.mxu0 %v1822
    %2062 = vmatmul.mubr.bf16.gmra.mrb[0].mxu0 %v1819
    %v2063 = vpop.f32.mrb[0].mxu0
    %v2064 = vadd.f32 0.0, %v2063
    %v2065 = vpop.f32.mrb[0].mxu0
    %v2066 = vadd.f32 0.0, %v2065
    %v2067 = vpop.f32.mrb[0].mxu0
    %v2068 = vadd.f32 0.0, %v2067
    %v2069 = vpop.f32.mrb[0].mxu0
    %v2070 = vadd.f32 0.0, %v2069
    %2071 = vdwg.mxu0
    %v2072 = vadd.f32 %v1784, %v2054
    %v2073 = vadd.f32 %v1786, %v2056
    %v2074 = vadd.f32 %v1788, %v2058
    %v2075 = vadd.f32 %v1790, %v2060
    %v2076 = vadd.f32 %v1794, %v2064
    %v2077 = vadd.f32 %v1796, %v2066
    %v2078 = vadd.f32 %v1798, %v2068
    %v2079 = vadd.f32 %v1800, %v2070
    %v2080 = vld [vmem:[%s10] sm:$0x3]
    %v2081 = vld [vmem:[%s11] sm:$0x3]
    %v2082 = vadd.f32 %v2072, %v2074
    %v2083 = vadd.f32 %v2082, %v2076
    %v2084 = vadd.f32 %v2083, %v2078
    %v2085 = vrot.slane %v2084, 4
    %v2086 = vadd.f32 %v2084, %v2085
    %v2087 = vrot.slane %v2086, 2
    %v2088 = vadd.f32 %v2086, %v2087
    %v2089 = vrot.slane %v2088, 1
    %v2090 = vadd.f32 %v2088, %v2089
    %v2091 = vadd.f32 %v2073, %v2075
    %v2092 = vadd.f32 %v2091, %v2077
    %v2093 = vadd.f32 %v2092, %v2079
    %v2094 = vrot.slane %v2093, 4
    %v2095 = vadd.f32 %v2093, %v2094
    %v2096 = vrot.slane %v2095, 2
    %v2097 = vadd.f32 %v2095, %v2096
    %v2098 = vrot.slane %v2097, 1
    %v2099 = vadd.f32 %v2097, %v2098
    %2100 = vmatprep.subr.mxu0 %v894
    %2101 = vmatpush1.msra.mxu0 %v893
    %2102 = vmatprep.subr.mxu0 %v896
    %2103 = vmatpush1.msra.mxu0 %v895
    %2104 = vmatprep.subr.mxu0 %v898
    %2105 = vmatpush1.msra.mxu0 %v897
    %2106 = vmatprep.subr.mxu0 %v900
    %2107 = vmatpush1.msra.mxu0 %v899
    %2108 = vmatprep.subr.mxu0 %v902
    %2109 = vmatpush1.msra.mxu0 %v901
    %2110 = vmatprep.subr.mxu0 %v904
    %2111 = vmatpush1.msra.mxu0 %v903
    %2112 = vmatprep.subr.mxu0 %v906
    %2113 = vmatpush1.msra.mxu0 %v905
    %2114 = vmatprep.subr.mxu0 %v908
    %2115 = vmatpush1.msra.mxu0 %v907
    %2116 = vmatprep.subr.mxu0 %v910
    %2117 = vmatpush1.msra.mxu0 %v909
    %2118 = vmatprep.subr.mxu0 %v912
    %2119 = vmatpush1.msra.mxu0 %v911
    %2120 = vmatprep.subr.mxu0 %v914
    %2121 = vmatpush1.msra.mxu0 %v913
    %2122 = vmatprep.subr.mxu0 %v916
    %2123 = vmatpush1.msra.mxu0 %v915
    %2124 = vmatprep.subr.mxu0 %v918
    %2125 = vmatpush1.msra.mxu0 %v917
    %2126 = vmatprep.subr.mxu0 %v920
    %2127 = vmatpush1.msra.mxu0 %v919
    %2128 = vmatprep.subr.mxu0 %v922
    %2129 = vmatpush1.msra.mxu0 %v921
    %2130 = vmatprep.subr.mxu0 %v924
    %2131 = vmatpush1.msra.mxu0 %v923
    %2132 = vmatprep.subr.mxu0 %v926
    %2133 = vmatpush1.msra.mxu0 %v925
    %2134 = vmatprep.subr.mxu0 %v928
    %2135 = vmatpush1.msra.mxu0 %v927
    %2136 = vmatprep.subr.mxu0 %v930
    %2137 = vmatpush1.msra.mxu0 %v929
    %2138 = vmatprep.subr.mxu0 %v932
    %2139 = vmatpush1.msra.mxu0 %v931
    %2140 = vmatprep.subr.mxu0 %v934
    %2141 = vmatpush1.msra.mxu0 %v933
    %2142 = vmatprep.subr.mxu0 %v936
    %2143 = vmatpush1.msra.mxu0 %v935
    %2144 = vmatprep.subr.mxu0 %v938
    %2145 = vmatpush1.msra.mxu0 %v937
    %2146 = vmatprep.subr.mxu0 %v940
    %2147 = vmatpush1.msra.mxu0 %v939
    %2148 = vmatprep.subr.mxu0 %v942
    %2149 = vmatpush1.msra.mxu0 %v941
    %2150 = vmatprep.subr.mxu0 %v944
    %2151 = vmatpush1.msra.mxu0 %v943
    %2152 = vmatprep.subr.mxu0 %v946
    %2153 = vmatpush1.msra.mxu0 %v945
    %2154 = vmatprep.subr.mxu0 %v948
    %2155 = vmatpush1.msra.mxu0 %v947
    %2156 = vmatprep.subr.mxu0 %v950
    %2157 = vmatpush1.msra.mxu0 %v949
    %2158 = vmatprep.subr.mxu0 %v952
    %2159 = vmatpush1.msra.mxu0 %v951
    %2160 = vmatprep.subr.mxu0 %v954
    %2161 = vmatpush1.msra.mxu0 %v953
    %2162 = vmatprep.subr.mxu0 %v956
    %2163 = vmatpush1.msra.mxu0 %v955
    %2164 = vmatprep.mubr.f32.mxu0 %v2099
    %2165 = vmatmul.mubr.f32.gmra.mrb[0].mxu0 %v2090
    %v2166 = vpop.f32.mrb[0].mxu0
    %v2167 = vadd.f32 0.0, %v2166
    %v2168 = vpop.f32.mrb[0].mxu0
    %v2169 = vadd.f32 0.0, %v2168
    %2170 = vdwg.mxu0
    %v2171 = vlaneseq
    %v2172 = vshrl.u32 %v2171, 7
    %v2173 = vsub.s32 0, %v2172
    %v2174 = vrot.slane %v2167, %v2173
    %v2175 = vlaneseq
    %v2176 = vshrl.u32 %v2175, 7
    %v2177 = vsub.s32 0, %v2176
    %v2178 = vrot.slane %v2169, %v2177
    %v2179 = vsub.f32 %v2072, %v2174
    %v2180 = vsub.f32 %v2073, %v2178
    %v2181 = vsub.f32 %v2074, %v2174
    %v2182 = vsub.f32 %v2075, %v2178
    %v2183 = vsub.f32 %v2076, %v2174
    %v2184 = vsub.f32 %v2077, %v2178
    %v2185 = vsub.f32 %v2078, %v2174
    %v2186 = vsub.f32 %v2079, %v2178
    %v2187 = vmul.f32 %v2179, %v2179
    %v2188 = vmul.f32 %v2180, %v2180
    %v2189 = vmul.f32 %v2181, %v2181
    %v2190 = vmul.f32 %v2182, %v2182
    %v2191 = vmul.f32 %v2183, %v2183
    %v2192 = vmul.f32 %v2184, %v2184
    %v2193 = vmul.f32 %v2185, %v2185
    %v2194 = vmul.f32 %v2186, %v2186
    %v2195 = vadd.f32 %v2187, %v2189
    %v2196 = vadd.f32 %v2195, %v2191
    %v2197 = vadd.f32 %v2196, %v2193
    %v2198 = vrot.slane %v2197, 4
    %v2199 = vadd.f32 %v2197, %v2198
    %v2200 = vrot.slane %v2199, 2
    %v2201 = vadd.f32 %v2199, %v2200
    %v2202 = vrot.slane %v2201, 1
    %v2203 = vadd.f32 %v2201, %v2202
    %v2204 = vadd.f32 %v2188, %v2190
    %v2205 = vadd.f32 %v2204, %v2192
    %v2206 = vadd.f32 %v2205, %v2194
    %v2207 = vrot.slane %v2206, 4
    %v2208 = vadd.f32 %v2206, %v2207
    %v2209 = vrot.slane %v2208, 2
    %v2210 = vadd.f32 %v2208, %v2209
    %v2211 = vrot.slane %v2210, 1
    %v2212 = vadd.f32 %v2210, %v2211
    %2213 = vmatprep.subr.mxu0 %v894
    %2214 = vmatpush1.msra.mxu0 %v893
    %2215 = vmatprep.subr.mxu0 %v896
    %2216 = vmatpush1.msra.mxu0 %v895
    %2217 = vmatprep.subr.mxu0 %v898
    %2218 = vmatpush1.msra.mxu0 %v897
    %2219 = vmatprep.subr.mxu0 %v900
    %2220 = vmatpush1.msra.mxu0 %v899
    %2221 = vmatprep.subr.mxu0 %v902
    %2222 = vmatpush1.msra.mxu0 %v901
    %2223 = vmatprep.subr.mxu0 %v904
    %2224 = vmatpush1.msra.mxu0 %v903
    %2225 = vmatprep.subr.mxu0 %v906
    %2226 = vmatpush1.msra.mxu0 %v905
    %2227 = vmatprep.subr.mxu0 %v908
    %2228 = vmatpush1.msra.mxu0 %v907
    %2229 = vmatprep.subr.mxu0 %v910
    %2230 = vmatpush1.msra.mxu0 %v909
    %2231 = vmatprep.subr.mxu0 %v912
    %2232 = vmatpush1.msra.mxu0 %v911
    %2233 = vmatprep.subr.mxu0 %v914
    %2234 = vmatpush1.msra.mxu0 %v913
    %2235 = vmatprep.subr.mxu0 %v916
    %2236 = vmatpush1.msra.mxu0 %v915
    %2237 = vmatprep.subr.mxu0 %v918
    %2238 = vmatpush1.msra.mxu0 %v917
    %2239 = vmatprep.subr.mxu0 %v920
    %2240 = vmatpush1.msra.mxu0 %v919
    %2241 = vmatprep.subr.mxu0 %v922
    %2242 = vmatpush1.msra.mxu0 %v921
    %2243 = vmatprep.subr.mxu0 %v924
    %2244 = vmatpush1.msra.mxu0 %v923
    %2245 = vmatprep.subr.mxu0 %v926
    %2246 = vmatpush1.msra.mxu0 %v925
    %2247 = vmatprep.subr.mxu0 %v928
    %2248 = vmatpush1.msra.mxu0 %v927
    %2249 = vmatprep.subr.mxu0 %v930
    %2250 = vmatpush1.msra.mxu0 %v929
    %2251 = vmatprep.subr.mxu0 %v932
    %2252 = vmatpush1.msra.mxu0 %v931
    %2253 = vmatprep.subr.mxu0 %v934
    %2254 = vmatpush1.msra.mxu0 %v933
    %2255 = vmatprep.subr.mxu0 %v936
    %2256 = vmatpush1.msra.mxu0 %v935
    %2257 = vmatprep.subr.mxu0 %v938
    %2258 = vmatpush1.msra.mxu0 %v937
    %2259 = vmatprep.subr.mxu0 %v940
    %2260 = vmatpush1.msra.mxu0 %v939
    %2261 = vmatprep.subr.mxu0 %v942
    %2262 = vmatpush1.msra.mxu0 %v941
    %2263 = vmatprep.subr.mxu0 %v944
    %2264 = vmatpush1.msra.mxu0 %v943
    %2265 = vmatprep.subr.mxu0 %v946
    %2266 = vmatpush1.msra.mxu0 %v945
    %2267 = vmatprep.subr.mxu0 %v948
    %2268 = vmatpush1.msra.mxu0 %v947
    %2269 = vmatprep.subr.mxu0 %v950
    %2270 = vmatpush1.msra.mxu0 %v949
    %2271 = vmatprep.subr.mxu0 %v952
    %2272 = vmatpush1.msra.mxu0 %v951
    %2273 = vmatprep.subr.mxu0 %v954
    %2274 = vmatpush1.msra.mxu0 %v953
    %2275 = vmatprep.subr.mxu0 %v956
    %2276 = vmatpush1.msra.mxu0 %v955
    %2277 = vmatprep.mubr.f32.mxu0 %v2212
    %2278 = vmatmul.mubr.f32.gmra.mrb[0].mxu0 %v2203
    %v2279 = vpop.f32.mrb[0].mxu0
    %v2280 = vadd.f32 1e-05, %v2279
    %v2281 = vpop.f32.mrb[0].mxu0
    %v2282 = vadd.f32 1e-05, %v2281
    %2283 = vdwg.mxu0
    %v2284 = vrsqrt.pop %v2280
    %v2285 = vrsqrt.pop %v2282
    %v2288 = vcombine.low %v2284, %v2285
    %v2290 = vunpack.c.l.s4 1966171168
    %v2291 = vunpack.c.0.s8 %v2290
    %v2292 = vlaneseq
    %v2293 = vshrl.u32 %v2292, 7
    %v2294 = vsub.s32 %v2291, %v2293
    %v2295 = vrot.slane %v2288, %v2294
    %v2297 = vunpack.c.l.s4 1966171168
    %v2298 = vunpack.c.0.s8 %v2297
    %v2299 = vlaneseq
    %v2300 = vshrl.u32 %v2299, 7
    %v2301 = vsub.s32 %v2298, %v2300
    %v2302 = vrot.slane %v2295, %v2301
    %v2304 = vmul.f32 %v2080, %v2302
    %v2306 = vlaneseq
    %v2307 = vshrl.u32 %v2306, 7
    %v2308 = vsub.s32 0, %v2307
    %v2309 = vrot.slane %v2304, %v2308
    %v2310 = vlaneseq
    %v2311 = vshrl.u32 %v2310, 7
    %v2312 = vsub.s32 1, %v2311
    %v2313 = vrot.slane %v2304, %v2312
    %v2316 = vmul.f32 %v2179, %v2309
    %v2317 = vmul.f32 %v2180, %v2313
    %v2318 = vmul.f32 %v2181, %v2309
    %v2319 = vmul.f32 %v2182, %v2313
    %v2320 = vmul.f32 %v2183, %v2309
    %v2321 = vmul.f32 %v2184, %v2313
    %v2322 = vmul.f32 %v2185, %v2309
    %v2323 = vmul.f32 %v2186, %v2313
    %v2325 = vlaneseq
    %v2326 = vshrl.u32 %v2325, 7
    %v2327 = vsub.s32 0, %v2326
    %v2328 = vrot.slane %v2081, %v2327
    %v2329 = vlaneseq
    %v2330 = vshrl.u32 %v2329, 7
    %v2331 = vsub.s32 1, %v2330
    %v2332 = vrot.slane %v2081, %v2331
    %v2335 = vadd.f32 %v2316, %v2328
    %v2336 = vadd.f32 %v2317, %v2332
    %v2337 = vadd.f32 %v2318, %v2328
    %v2338 = vadd.f32 %v2319, %v2332
    %v2339 = vadd.f32 %v2320, %v2328
    %v2340 = vadd.f32 %v2321, %v2332
    %v2341 = vadd.f32 %v2322, %v2328
    %v2342 = vadd.f32 %v2323, %v2332
    %v2343 = vadd.f32 %v2335, %v865
    %v2344 = vadd.f32 %v2336, %v866
    %v2345 = vadd.f32 %v2337, %v867
    %v2346 = vadd.f32 %v2338, %v868
    %v2347 = vadd.f32 %v2339, %v869
    %v2348 = vadd.f32 %v2340, %v870
    %v2349 = vadd.f32 %v2341, %v871
    %v2350 = vadd.f32 %v2342, %v872
    %v2351 = vmax.f32 %v2343, 0.0
    %v2352 = vmax.f32 %v2344, 0.0
    %v2353 = vmax.f32 %v2345, 0.0
    %v2354 = vmax.f32 %v2346, 0.0
    %v2355 = vmax.f32 %v2347, 0.0
    %v2356 = vmax.f32 %v2348, 0.0
    %v2357 = vmax.f32 %v2349, 0.0
    %v2358 = vmax.f32 %v2350, 0.0
    %2359 = vst [vmem:[#allocation14] sm:$0xff] %v2351
    %2360 = vst [vmem:[#allocation14 + $0x8] sm:$0xff] %v2352
    %2361 = vst [vmem:[#allocation14 + $0x10] sm:$0xff] %v2353
    %2362 = vst [vmem:[#allocation14 + $0x18] sm:$0xff] %v2354
    %2363 = vst [vmem:[#allocation14 + $0x20] sm:$0xff] %v2355
    %2364 = vst [vmem:[#allocation14 + $0x28] sm:$0xff] %v2356
    %2365 = vst [vmem:[#allocation14 + $0x30] sm:$0xff] %v2357
    %2366 = vst [vmem:[#allocation14 + $0x38] sm:$0xff] %v2358
    // Predicated region
    $region82: #{tpu_custom_call.1} parent=1 // pred_check
      _
    $region83: #{tpu_custom_call.1} parent=1 // pred_check_branch
      %2368 = sbr.rel (0) target = $region85
    $region84: #{tpu_custom_call.1} parent=1 // pred_region
      %s2370 = ssub.s32 1024, 1024
      %2371 = vsyncadd [#allocation4], %s2370
      %s2372 = sshll.u32 [#allocation14], 4
      %s2373 = int_to_ptr.vmem [resolvable:$true] %s2372
      %2378 = dma.vmem_to_hbm [thread:$0]  %s2373, 1024, %s13, [#allocation4], 256, 256, 16
    $region85: #{tpu_custom_call.1} parent=1 // pred_fallthru
      _
    // Predicated region
    $region86: #{tpu_custom_call.1} parent=1 // pred_check
      _
    $region87: #{tpu_custom_call.1} parent=1 // pred_check_branch
      %2380 = sbr.rel (0) target = $region89
    $region88: #{tpu_custom_call.1} parent=1 // pred_region
      %2381 = dma.done [#allocation4], 1024
    $region89: #{tpu_custom_call.1} parent=1 // pred_fallthru
      _
    %2382 = vsyncpa [#allocation3], 1
    %2383 = vsyncpa [#allocation6], 1
    %2384 = vsyncpa [#allocation9], 1
    %2385 = vsyncpa [#allocation12], 1
    %2386 = vsyncpa [#allocation4], 1

</llo_original>
